<compile_context>
chip_gen: v5e
topology: v5e:2x2
jax: 0.10.0
libtpu: 0.0.40
codegen_flags: <defaults>
</compile_context>

<pallas_src>
import jax
import jax.numpy as jnp
from jax.experimental import pallas as pl
from jax.experimental.pallas import tpu as pltpu

EMB = 64
EPS = 1e-5                       # torch.nn.LayerNorm default eps
_NT = (((1,), (1,)), ((), ()))   # dot_general "NT": contract the last dim of both operands

# ---------------------------------------------------------------- packed parameter layout
# All [1,k] row parameters (biases, LN gains/biases, transposed head weight) are zero-padded
# to [1,EMB] and stacked into one [24,EMB] array; all weight matrices are row-stacked (each
# block padded to a multiple of 8 rows so every static slice below is sublane-aligned).
_R_NAMES = (
    "cons_g", "cons_b", "cons_b1", "cons_b2",
    "var_g", "var_b", "var_b1", "var_b2",
    "a_blr", "a_lng", "a_lnb", "a_bf", "a_png", "a_pnb", "a_bo1",
    "b_blr", "b_lng", "b_lnb", "b_bf", "b_png", "b_pnb", "b_bo1",
    "h_b", "h_w2t",
)
_R_IDX = {n: i for i, n in enumerate(_R_NAMES)}

_W_LAYOUT = (
    ("cons_w1", 5), ("var_w1", 19), ("cons_w2", EMB), ("var_w2", EMB),
    ("a_wl", EMB), ("a_wr", EMB), ("a_wf", EMB), ("a_wo1", 2 * EMB),
    ("b_wl", EMB), ("b_wr", EMB), ("b_wf", EMB), ("b_wo1", 2 * EMB),
    ("h_w", EMB),
)
_W_OFF = {}
_off = 0
for _n, _r in _W_LAYOUT:
    _W_OFF[_n] = (_off, _r)
    _off += -(-_r // 8) * 8      # pad each block to a sublane multiple -> aligned slices
_W_ROWS = _off


# ----------------------------------------------------------------------------- in-kernel helpers
def _ln(x, g, b):
    m = jnp.mean(x, axis=-1, keepdims=True)
    v = jnp.mean((x - m) ** 2, axis=-1, keepdims=True)    # biased variance (PyTorch LN)
    return (x - m) * jax.lax.rsqrt(v + EPS) * g + b


def _embed(x, g, b, w1, b1, w2, b2):
    # LayerNorm -> Linear -> ReLU -> Linear -> ReLU
    h = _ln(x, g, b)
    h = jnp.maximum(jnp.dot(h, w1, preferred_element_type=jnp.float32) + b1, 0.0)
    return jnp.maximum(jnp.dot(h, w2, preferred_element_type=jnp.float32) + b2, 0.0)


def _oh_dot(mask, payload):
    # Gather / scatter-add expressed as a one-hot matmul on the MXU.  0/1 one-hot values
    # are exact in bf16; the payload sees one bf16 rounding; accumulation stays f32.
    return jnp.dot(mask.astype(jnp.float32).astype(jnp.bfloat16),
                   payload.astype(jnp.bfloat16),
                   preferred_element_type=jnp.float32)


def _conv_core(lproj, rproj, right, src_col, dst_col, dst_row,
               blr, lng, lnb, wf, bf, png, pnb, wo1_agg, wo1_right, bo1):
    # BipartiteGraphConvolution (torch_geometric MessagePassing, aggr='add') with three
    # exact rewrites:
    #   * project-before-gather: right@wl / left@wr are computed once per node by the
    #     caller; only the projected rows are gathered per edge (no [E,128] concat).
    #   * feature_module_final (wf, bf) commuted past the scatter-add:
    #       agg = (scatter @ relu_ln) @ wf + deg * bf
    #   * output_module first linear applied as its two K=64 halves (no [Nr,128] concat).
    # The output_module second linear (wo2, bo2) is folded downstream at trace time.
    E = src_col.shape[0]
    Nl = lproj.shape[0]
    Nr = right.shape[0]

    oh_src = src_col == jax.lax.broadcasted_iota(jnp.int32, (E, Nl), 1)
    oh_dst = dst_col == jax.lax.broadcasted_iota(jnp.int32, (E, Nr), 1)
    pre = _oh_dot(oh_src, lproj) + _oh_dot(oh_dst, rproj) + blr            # [E, EMB]
    msg = jnp.maximum(_ln(pre, lng, lnb), 0.0)                             # [E, EMB]

    # scatter-add over dst: one-hot built directly in [Nr, E] orientation (no transpose)
    sc = dst_row == jax.lax.broadcasted_iota(jnp.int32, (Nr, E), 0)        # [Nr, E]
    deg = jnp.sum(sc.astype(jnp.float32), axis=-1, keepdims=True)          # [Nr, 1]
    agg = jnp.dot(_oh_dot(sc, msg), wf, preferred_element_type=jnp.float32) + deg * bf

    h = (jnp.dot(_ln(agg, png, pnb), wo1_agg, preferred_element_type=jnp.float32)
         + jnp.dot(right, wo1_right, preferred_element_type=jnp.float32) + bo1)
    return jnp.maximum(h, 0.0)                                             # [Nr, EMB]


# ----------------------------------------------------------------------------- fused kernel
def _gnn2_fused_kernel(cons_ref, var_ref, idx_col_ref, idx_row_ref, rows_ref, w_ref, out_ref):
    def R(name, width=EMB):                 # [1, width] row from the packed row-vector table
        i = _R_IDX[name]
        return rows_ref[i:i + 1, 0:width]

    def W(name):                            # [rows, EMB] block from the packed weight table
        off, n = _W_OFF[name]
        return w_ref[off:off + n, :]

    def W2(name):                           # split a [2*EMB, EMB] weight into its two halves
        off, _ = _W_OFF[name]
        return w_ref[off:off + EMB, :], w_ref[off + EMB:off + 2 * EMB, :]

    cidx_col = idx_col_ref[:, 0:1]          # [E, 1] constraint index per edge
    vidx_col = idx_col_ref[:, 1:2]          # [E, 1] variable index per edge
    cidx_row = idx_row_ref[0:1, :]          # [1, E]
    vidx_row = idx_row_ref[1:2, :]          # [1, E]

    # node embeddings (stay resident in vregs/VMEM)
    c = _embed(cons_ref[...], R("cons_g", 5), R("cons_b", 5),
               W("cons_w1"), R("cons_b1"), W("cons_w2"), R("cons_b2"))
    v = _embed(var_ref[...], R("var_g", 19), R("var_b", 19),
               W("var_w1"), R("var_b1"), W("var_w2"), R("var_b2"))

    # conv_v_to_c: left = variables (src = var idx), right = constraints (dst = cons idx)
    a_wo1_agg, a_wo1_right = W2("a_wo1")
    h1_c = _conv_core(
        jnp.dot(v, W("a_wr"), preferred_element_type=jnp.float32),   # left proj, per node
        jnp.dot(c, W("a_wl"), preferred_element_type=jnp.float32),   # right proj, per node
        c, vidx_col, cidx_col, cidx_row,
        R("a_blr"), R("a_lng"), R("a_lnb"), W("a_wf"), R("a_bf"),
        R("a_png"), R("a_pnb"), a_wo1_agg, a_wo1_right, R("a_bo1"))

    # conv_c_to_v: left = constraints (src = cons idx), right = variables (dst = var idx).
    # conv_v_to_c's wo2/bo2 are folded into b_wr / b_blr at trace time, so the constraint
    # output is only consumed through this single projection of its wo1+ReLU hidden.
    b_wo1_agg, b_wo1_right = W2("b_wo1")
    h1_v = _conv_core(
        jnp.dot(h1_c, W("b_wr"), preferred_element_type=jnp.float32),
        jnp.dot(v, W("b_wl"), preferred_element_type=jnp.float32),
        v, cidx_col, vidx_col, vidx_row,
        R("b_blr"), R("b_lng"), R("b_lnb"), W("b_wf"), R("b_bf"),
        R("b_png"), R("b_pnb"), b_wo1_agg, b_wo1_right, R("b_bo1"))

    # head: conv_c_to_v's wo2/bo2 are folded with the head's first linear (h_w / h_b).
    h = jnp.maximum(jnp.dot(h1_v, W("h_w"), preferred_element_type=jnp.float32) + R("h_b"), 0.0)
    # lane-dense output [1, Nv]: contract over the feature axis of both operands (NT form)
    # so Nv lands on the lane axis; the wrapper squeezes row 0.
    out_ref[...] = jax.lax.dot_general(R("h_w2t"), h, _NT,
                                       preferred_element_type=jnp.float32)


# ----------------------------------------------------------------------------- wrapper
def gnn2_forward(params, constraint_features, edge_indices, edge_features, variable_features):
    # edge_indices[0] = constraint index, edge_indices[1] = variable index
    del edge_features  # LN over a size-1 feature axis is identically its bias (folded below). Exact.
    Nv = variable_features.shape[0]

    ei = edge_indices.astype(jnp.int32)
    idx_rows = ei              # [2, E]  row-oriented (for the scatter one-hots)
    idx_cols = ei.T            # [E, 2]  column-oriented (for the gather one-hots)

    ce, ve = params["cons_emb"], params["var_emb"]
    A, B, hd = params["conv_v_to_c"], params["conv_c_to_v"], params["head"]
    edge_b = params["edge_emb"]["b"]                        # [1, 1]

    # trace-time exact folds (see header comment)
    row_vals = {
        "cons_g": ce["g"], "cons_b": ce["b"], "cons_b1": ce["b1"], "cons_b2": ce["b2"],
        "var_g": ve["g"], "var_b": ve["b"], "var_b1": ve["b1"], "var_b2": ve["b2"],
        "a_blr": A["bl"] + edge_b * A["we"],
        "a_lng": A["lng"], "a_lnb": A["lnb"], "a_bf": A["bf"],
        "a_png": A["png"], "a_pnb": A["pnb"], "a_bo1": A["bo1"],
        "b_blr": B["bl"] + edge_b * B["we"] + A["bo2"] @ B["wr"],
        "b_lng": B["lng"], "b_lnb": B["lnb"], "b_bf": B["bf"],
        "b_png": B["png"], "b_pnb": B["pnb"], "b_bo1": B["bo1"],
        "h_b": B["bo2"] @ hd["w1"] + hd["b1"],
        "h_w2t": hd["w2"].T,
    }
    rows_pack = jnp.concatenate(
        [jnp.pad(row_vals[n], ((0, 0), (0, EMB - row_vals[n].shape[1]))) for n in _R_NAMES],
        axis=0)
    assert rows_pack.shape == (len(_R_NAMES), EMB)

    w_vals = {
        "cons_w1": ce["w1"], "var_w1": ve["w1"], "cons_w2": ce["w2"], "var_w2": ve["w2"],
        "a_wl": A["wl"], "a_wr": A["wr"], "a_wf": A["wf"], "a_wo1": A["wo1"],
        "b_wl": B["wl"], "b_wr": A["wo2"] @ B["wr"], "b_wf": B["wf"], "b_wo1": B["wo1"],
        "h_w": B["wo2"] @ hd["w1"],
    }
    w_pack = jnp.concatenate(
        [jnp.pad(w_vals[n], ((0, -(-r // 8) * 8 - r), (0, 0))) for n, r in _W_LAYOUT],
        axis=0)
    assert w_pack.shape == (_W_ROWS, EMB)

    out = pl.pallas_call(
        _gnn2_fused_kernel,
        out_shape=jax.ShapeDtypeStruct((1, Nv), jnp.float32),   # lane-dense: Nv on the lane axis
        in_specs=[pl.BlockSpec(memory_space=pltpu.MemorySpace.VMEM)] * 6,
        out_specs=pl.BlockSpec(memory_space=pltpu.MemorySpace.VMEM),
        compiler_params=pltpu.CompilerParams(vmem_limit_bytes=32 * 1024 * 1024),
    )(constraint_features, variable_features, idx_cols, idx_rows, rows_pack, w_pack)
    return out[0]   # [Nv]  (== squeeze(-1) of the reference orientation)


# ----------------------------------------------------------------------------- deterministic params
def init_params(key):
    keys = iter(jax.random.split(key, 64))

    def lin_w(fin, fout, scale=0.1):
        return jax.random.normal(next(keys), (fin, fout), jnp.float32) * scale

    def lin_b(fout, scale=0.01):
        return jax.random.normal(next(keys), (1, fout), jnp.float32) * scale

    def emb_params(nfeats):
        return dict(g=jnp.ones((1, nfeats), jnp.float32), b=jnp.zeros((1, nfeats), jnp.float32),
                    w1=lin_w(nfeats, EMB), b1=lin_b(EMB), w2=lin_w(EMB, EMB), b2=lin_b(EMB))

    def conv_params():
        return dict(
            wl=lin_w(EMB, EMB), bl=lin_b(EMB),            # feature_module_left  (Linear, bias)
            we=lin_w(1, EMB),                             # feature_module_edge  (Linear, no bias)
            wr=lin_w(EMB, EMB),                           # feature_module_right (Linear, no bias)
            lng=jnp.ones((1, EMB), jnp.float32), lnb=jnp.zeros((1, EMB), jnp.float32),
            wf=lin_w(EMB, EMB), bf=lin_b(EMB),            # feature_module_final Linear
            png=jnp.ones((1, EMB), jnp.float32), pnb=jnp.zeros((1, EMB), jnp.float32),
            wo1=lin_w(2 * EMB, EMB), bo1=lin_b(EMB),      # conv output_module
            wo2=lin_w(EMB, EMB), bo2=lin_b(EMB),
        )

    return dict(
        cons_emb=emb_params(5),
        edge_emb=dict(g=jnp.ones((1, 1), jnp.float32), b=jnp.zeros((1, 1), jnp.float32)),
        var_emb=emb_params(19),
        conv_v_to_c=conv_params(),
        conv_c_to_v=conv_params(),
        head=dict(w1=lin_w(EMB, EMB), b1=lin_b(EMB), w2=lin_w(EMB, 1)),
    )


# ----------------------------------------------------------------------------- pure-JAX reference
def _ref_forward(params, cons, ei, ef, var):
    def ln(x, g, b):
        m = x.mean(-1, keepdims=True)
        v = ((x - m) ** 2).mean(-1, keepdims=True)
        return (x - m) / jnp.sqrt(v + EPS) * g + b

    def emb(x, p):
        h = ln(x, p["g"], p["b"])
        h = jnp.maximum(h @ p["w1"] + p["b1"], 0.0)
        return jnp.maximum(h @ p["w2"] + p["b2"], 0.0)

    def conv(left, right, ef, src, dst, p):
        pre = (right[dst] @ p["wl"] + p["bl"]) + ef @ p["we"] + left[src] @ p["wr"]
        msg = jnp.maximum(ln(pre, p["lng"], p["lnb"]), 0.0) @ p["wf"] + p["bf"]
        agg = jnp.zeros((right.shape[0], EMB), jnp.float32).at[dst].add(msg)
        h = jnp.concatenate([ln(agg, p["png"], p["pnb"]), right], -1)
        h = jnp.maximum(h @ p["wo1"] + p["bo1"], 0.0)
        return h @ p["wo2"] + p["bo2"]

    cons_idx, var_idx = ei[0], ei[1]
    c = emb(cons, params["cons_emb"])
    e = ln(ef, params["edge_emb"]["g"], params["edge_emb"]["b"])
    v = emb(var, params["var_emb"])
    c = conv(v, c, e, var_idx, cons_idx, params["conv_v_to_c"])
    v = conv(c, v, e, cons_idx, var_idx, params["conv_c_to_v"])
    h = jnp.maximum(v @ params["head"]["w1"] + params["head"]["b1"], 0.0)
    return (h @ params["head"]["w2"])[:, 0]


# ----------------------------------------------------------------------------- main
if __name__ == "__main__":
    key = jax.random.PRNGKey(0)
    kp, kc, kv, ke, ki1, ki2 = jax.random.split(key, 6)

    n_cons, n_vars, n_edges = 8, 16, 24
    constraint_features = jax.random.normal(kc, (n_cons, 5), jnp.float32)
    variable_features = jax.random.normal(kv, (n_vars, 19), jnp.float32)
    edge_features = jax.random.normal(ke, (n_edges, 1), jnp.float32)
    edge_indices = jnp.stack([
        jax.random.randint(ki1, (n_edges,), 0, n_cons),
        jax.random.randint(ki2, (n_edges,), 0, n_vars),
    ]).astype(jnp.int32)

    params = init_params(kp)

    fwd = jax.jit(gnn2_forward)
    out = fwd(params, constraint_features, edge_indices, edge_features, variable_features)
    out = jax.block_until_ready(out)

    ref = _ref_forward(params, constraint_features, edge_indices, edge_features, variable_features)
    assert out.shape == (n_vars,)
    assert jnp.allclose(out, ref, rtol=2e-2, atol=2e-2), (out, ref)

    print("KERNEL_OK")
</pallas_src>

<mosaic_0001>
module attributes {stable_mosaic.version = 11 : i64} {
  func.func @_gnn2_fused_kernel(%arg0: memref<8x5xf32, #tpu.memory_space<vmem>>, %arg1: memref<16x19xf32, #tpu.memory_space<vmem>>, %arg2: memref<24x2xi32, #tpu.memory_space<vmem>>, %arg3: memref<2x24xi32, #tpu.memory_space<vmem>>, %arg4: memref<24x64xf32, #tpu.memory_space<vmem>>, %arg5: memref<864x64xf32, #tpu.memory_space<vmem>>, %arg6: memref<1x16xf32, #tpu.memory_space<vmem>>) attributes {dimension_semantics = [], scalar_prefetch = 0 : i64, scratch_operands = 0 : i64, tpu.core_type = #tpu.core_type<tc>} {
    %c0 = arith.constant 0 : index
    %c0_0 = arith.constant 0 : index
    %0 = vector.load %arg2[%c0, %c0_0] : memref<24x2xi32, #tpu.memory_space<vmem>>, vector<24x1xi32>
    %c0_1 = arith.constant 0 : index
    %c1 = arith.constant 1 : index
    %1 = vector.load %arg2[%c0_1, %c1] : memref<24x2xi32, #tpu.memory_space<vmem>>, vector<24x1xi32>
    %c0_2 = arith.constant 0 : index
    %c0_3 = arith.constant 0 : index
    %2 = vector.load %arg3[%c0_2, %c0_3] : memref<2x24xi32, #tpu.memory_space<vmem>>, vector<1x24xi32>
    %c1_4 = arith.constant 1 : index
    %c0_5 = arith.constant 0 : index
    %3 = vector.load %arg3[%c1_4, %c0_5] : memref<2x24xi32, #tpu.memory_space<vmem>>, vector<1x24xi32>
    %c0_6 = arith.constant 0 : index
    %c0_7 = arith.constant 0 : index
    %4 = vector.load %arg0[%c0_6, %c0_7] : memref<8x5xf32, #tpu.memory_space<vmem>>, vector<8x5xf32>
    %c0_8 = arith.constant 0 : index
    %c0_9 = arith.constant 0 : index
    %5 = vector.load %arg4[%c0_8, %c0_9] : memref<24x64xf32, #tpu.memory_space<vmem>>, vector<1x5xf32>
    %c1_10 = arith.constant 1 : index
    %c0_11 = arith.constant 0 : index
    %6 = vector.load %arg4[%c1_10, %c0_11] : memref<24x64xf32, #tpu.memory_space<vmem>>, vector<1x5xf32>
    %c0_12 = arith.constant 0 : index
    %c0_13 = arith.constant 0 : index
    %7 = vector.load %arg5[%c0_12, %c0_13] : memref<864x64xf32, #tpu.memory_space<vmem>>, vector<5x64xf32>
    %c2 = arith.constant 2 : index
    %c0_14 = arith.constant 0 : index
    %8 = vector.load %arg4[%c2, %c0_14] : memref<24x64xf32, #tpu.memory_space<vmem>>, vector<1x64xf32>
    %c32 = arith.constant 32 : index
    %c0_15 = arith.constant 0 : index
    %9 = vector.load %arg5[%c32, %c0_15] : memref<864x64xf32, #tpu.memory_space<vmem>>, vector<64x64xf32>
    %c3 = arith.constant 3 : index
    %c0_16 = arith.constant 0 : index
    %10 = vector.load %arg4[%c3, %c0_16] : memref<24x64xf32, #tpu.memory_space<vmem>>, vector<1x64xf32>
    %cst = arith.constant dense<0.000000e+00> : vector<8xf32>
    %11 = vector.multi_reduction <add>, %4, %cst [1] : vector<8x5xf32> to vector<8xf32>
    %12 = vector.shape_cast %11 : vector<8xf32> to vector<8x1xf32>
    %cst_17 = arith.constant 5.000000e+00 : f32
    %13 = vector.broadcast %cst_17 : f32 to vector<8x1xf32>
    %14 = arith.divf %12, %13 : vector<8x1xf32>
    %15 = vector.broadcast %14 : vector<8x1xf32> to vector<8x5xf32>
    %16 = arith.subf %4, %15 : vector<8x5xf32>
    %17 = arith.mulf %16, %16 : vector<8x5xf32>
    %cst_18 = arith.constant dense<0.000000e+00> : vector<8xf32>
    %18 = vector.multi_reduction <add>, %17, %cst_18 [1] : vector<8x5xf32> to vector<8xf32>
    %19 = vector.shape_cast %18 : vector<8xf32> to vector<8x1xf32>
    %cst_19 = arith.constant 5.000000e+00 : f32
    %20 = vector.broadcast %cst_19 : f32 to vector<8x1xf32>
    %21 = arith.divf %19, %20 : vector<8x1xf32>
    %22 = vector.broadcast %14 : vector<8x1xf32> to vector<8x5xf32>
    %23 = arith.subf %4, %22 : vector<8x5xf32>
    %cst_20 = arith.constant 9.99999974E-6 : f32
    %24 = vector.broadcast %cst_20 : f32 to vector<8x1xf32>
    %25 = arith.addf %21, %24 : vector<8x1xf32>
    %26 = math.rsqrt %25 : vector<8x1xf32>
    %27 = vector.broadcast %26 : vector<8x1xf32> to vector<8x5xf32>
    %28 = arith.mulf %23, %27 : vector<8x5xf32>
    %29 = vector.broadcast %5 : vector<1x5xf32> to vector<8x5xf32>
    %30 = arith.mulf %28, %29 : vector<8x5xf32>
    %31 = vector.broadcast %6 : vector<1x5xf32> to vector<8x5xf32>
    %32 = arith.addf %30, %31 : vector<8x5xf32>
    %cst_21 = arith.constant dense<0.000000e+00> : vector<8x64xf32>
    %33 = tpu.matmul %32, %7, %cst_21 {dimension_numbers = #tpu.dot_dimension_numbers<[1], [0], [0], [1], [0, 0, 1, 1], [], []>} : vector<8x5xf32>, vector<5x64xf32>, vector<8x64xf32> -> vector<8x64xf32>
    %34 = vector.broadcast %8 : vector<1x64xf32> to vector<8x64xf32>
    %35 = arith.addf %33, %34 : vector<8x64xf32>
    %cst_22 = arith.constant 0.000000e+00 : f32
    %36 = vector.broadcast %cst_22 : f32 to vector<8x64xf32>
    %37 = arith.maximumf %35, %36 : vector<8x64xf32>
    %cst_23 = arith.constant dense<0.000000e+00> : vector<8x64xf32>
    %38 = tpu.matmul %37, %9, %cst_23 {dimension_numbers = #tpu.dot_dimension_numbers<[1], [0], [0], [1], [0, 0, 1, 1], [], []>} : vector<8x64xf32>, vector<64x64xf32>, vector<8x64xf32> -> vector<8x64xf32>
    %39 = vector.broadcast %10 : vector<1x64xf32> to vector<8x64xf32>
    %40 = arith.addf %38, %39 : vector<8x64xf32>
    %cst_24 = arith.constant 0.000000e+00 : f32
    %41 = vector.broadcast %cst_24 : f32 to vector<8x64xf32>
    %42 = arith.maximumf %40, %41 : vector<8x64xf32>
    %c0_25 = arith.constant 0 : index
    %c0_26 = arith.constant 0 : index
    %43 = vector.load %arg1[%c0_25, %c0_26] : memref<16x19xf32, #tpu.memory_space<vmem>>, vector<16x19xf32>
    %c4 = arith.constant 4 : index
    %c0_27 = arith.constant 0 : index
    %44 = vector.load %arg4[%c4, %c0_27] : memref<24x64xf32, #tpu.memory_space<vmem>>, vector<1x19xf32>
    %c5 = arith.constant 5 : index
    %c0_28 = arith.constant 0 : index
    %45 = vector.load %arg4[%c5, %c0_28] : memref<24x64xf32, #tpu.memory_space<vmem>>, vector<1x19xf32>
    %c8 = arith.constant 8 : index
    %c0_29 = arith.constant 0 : index
    %46 = vector.load %arg5[%c8, %c0_29] : memref<864x64xf32, #tpu.memory_space<vmem>>, vector<19x64xf32>
    %c6 = arith.constant 6 : index
    %c0_30 = arith.constant 0 : index
    %47 = vector.load %arg4[%c6, %c0_30] : memref<24x64xf32, #tpu.memory_space<vmem>>, vector<1x64xf32>
    %c96 = arith.constant 96 : index
    %c0_31 = arith.constant 0 : index
    %48 = vector.load %arg5[%c96, %c0_31] : memref<864x64xf32, #tpu.memory_space<vmem>>, vector<64x64xf32>
    %c7 = arith.constant 7 : index
    %c0_32 = arith.constant 0 : index
    %49 = vector.load %arg4[%c7, %c0_32] : memref<24x64xf32, #tpu.memory_space<vmem>>, vector<1x64xf32>
    %cst_33 = arith.constant dense<0.000000e+00> : vector<16xf32>
    %50 = vector.multi_reduction <add>, %43, %cst_33 [1] : vector<16x19xf32> to vector<16xf32>
    %51 = vector.shape_cast %50 : vector<16xf32> to vector<16x1xf32>
    %cst_34 = arith.constant 1.900000e+01 : f32
    %52 = vector.broadcast %cst_34 : f32 to vector<16x1xf32>
    %53 = arith.divf %51, %52 : vector<16x1xf32>
    %54 = vector.broadcast %53 : vector<16x1xf32> to vector<16x19xf32>
    %55 = arith.subf %43, %54 : vector<16x19xf32>
    %56 = arith.mulf %55, %55 : vector<16x19xf32>
    %cst_35 = arith.constant dense<0.000000e+00> : vector<16xf32>
    %57 = vector.multi_reduction <add>, %56, %cst_35 [1] : vector<16x19xf32> to vector<16xf32>
    %58 = vector.shape_cast %57 : vector<16xf32> to vector<16x1xf32>
    %cst_36 = arith.constant 1.900000e+01 : f32
    %59 = vector.broadcast %cst_36 : f32 to vector<16x1xf32>
    %60 = arith.divf %58, %59 : vector<16x1xf32>
    %61 = vector.broadcast %53 : vector<16x1xf32> to vector<16x19xf32>
    %62 = arith.subf %43, %61 : vector<16x19xf32>
    %cst_37 = arith.constant 9.99999974E-6 : f32
    %63 = vector.broadcast %cst_37 : f32 to vector<16x1xf32>
    %64 = arith.addf %60, %63 : vector<16x1xf32>
    %65 = math.rsqrt %64 : vector<16x1xf32>
    %66 = vector.broadcast %65 : vector<16x1xf32> to vector<16x19xf32>
    %67 = arith.mulf %62, %66 : vector<16x19xf32>
    %68 = vector.broadcast %44 : vector<1x19xf32> to vector<16x19xf32>
    %69 = arith.mulf %67, %68 : vector<16x19xf32>
    %70 = vector.broadcast %45 : vector<1x19xf32> to vector<16x19xf32>
    %71 = arith.addf %69, %70 : vector<16x19xf32>
    %cst_38 = arith.constant dense<0.000000e+00> : vector<16x64xf32>
    %72 = tpu.matmul %71, %46, %cst_38 {dimension_numbers = #tpu.dot_dimension_numbers<[1], [0], [0], [1], [0, 0, 1, 1], [], []>} : vector<16x19xf32>, vector<19x64xf32>, vector<16x64xf32> -> vector<16x64xf32>
    %73 = vector.broadcast %47 : vector<1x64xf32> to vector<16x64xf32>
    %74 = arith.addf %72, %73 : vector<16x64xf32>
    %cst_39 = arith.constant 0.000000e+00 : f32
    %75 = vector.broadcast %cst_39 : f32 to vector<16x64xf32>
    %76 = arith.maximumf %74, %75 : vector<16x64xf32>
    %cst_40 = arith.constant dense<0.000000e+00> : vector<16x64xf32>
    %77 = tpu.matmul %76, %48, %cst_40 {dimension_numbers = #tpu.dot_dimension_numbers<[1], [0], [0], [1], [0, 0, 1, 1], [], []>} : vector<16x64xf32>, vector<64x64xf32>, vector<16x64xf32> -> vector<16x64xf32>
    %78 = vector.broadcast %49 : vector<1x64xf32> to vector<16x64xf32>
    %79 = arith.addf %77, %78 : vector<16x64xf32>
    %cst_41 = arith.constant 0.000000e+00 : f32
    %80 = vector.broadcast %cst_41 : f32 to vector<16x64xf32>
    %81 = arith.maximumf %79, %80 : vector<16x64xf32>
    %c352 = arith.constant 352 : index
    %c0_42 = arith.constant 0 : index
    %82 = vector.load %arg5[%c352, %c0_42] : memref<864x64xf32, #tpu.memory_space<vmem>>, vector<64x64xf32>
    %c416 = arith.constant 416 : index
    %c0_43 = arith.constant 0 : index
    %83 = vector.load %arg5[%c416, %c0_43] : memref<864x64xf32, #tpu.memory_space<vmem>>, vector<64x64xf32>
    %c224 = arith.constant 224 : index
    %c0_44 = arith.constant 0 : index
    %84 = vector.load %arg5[%c224, %c0_44] : memref<864x64xf32, #tpu.memory_space<vmem>>, vector<64x64xf32>
    %cst_45 = arith.constant dense<0.000000e+00> : vector<16x64xf32>
    %85 = tpu.matmul %81, %84, %cst_45 {dimension_numbers = #tpu.dot_dimension_numbers<[1], [0], [0], [1], [0, 0, 1, 1], [], []>} : vector<16x64xf32>, vector<64x64xf32>, vector<16x64xf32> -> vector<16x64xf32>
    %c160 = arith.constant 160 : index
    %c0_46 = arith.constant 0 : index
    %86 = vector.load %arg5[%c160, %c0_46] : memref<864x64xf32, #tpu.memory_space<vmem>>, vector<64x64xf32>
    %cst_47 = arith.constant dense<0.000000e+00> : vector<8x64xf32>
    %87 = tpu.matmul %42, %86, %cst_47 {dimension_numbers = #tpu.dot_dimension_numbers<[1], [0], [0], [1], [0, 0, 1, 1], [], []>} : vector<8x64xf32>, vector<64x64xf32>, vector<8x64xf32> -> vector<8x64xf32>
    %c8_48 = arith.constant 8 : index
    %c0_49 = arith.constant 0 : index
    %88 = vector.load %arg4[%c8_48, %c0_49] : memref<24x64xf32, #tpu.memory_space<vmem>>, vector<1x64xf32>
    %c9 = arith.constant 9 : index
    %c0_50 = arith.constant 0 : index
    %89 = vector.load %arg4[%c9, %c0_50] : memref<24x64xf32, #tpu.memory_space<vmem>>, vector<1x64xf32>
    %c10 = arith.constant 10 : index
    %c0_51 = arith.constant 0 : index
    %90 = vector.load %arg4[%c10, %c0_51] : memref<24x64xf32, #tpu.memory_space<vmem>>, vector<1x64xf32>
    %c288 = arith.constant 288 : index
    %c0_52 = arith.constant 0 : index
    %91 = vector.load %arg5[%c288, %c0_52] : memref<864x64xf32, #tpu.memory_space<vmem>>, vector<64x64xf32>
    %c11 = arith.constant 11 : index
    %c0_53 = arith.constant 0 : index
    %92 = vector.load %arg4[%c11, %c0_53] : memref<24x64xf32, #tpu.memory_space<vmem>>, vector<1x64xf32>
    %c12 = arith.constant 12 : index
    %c0_54 = arith.constant 0 : index
    %93 = vector.load %arg4[%c12, %c0_54] : memref<24x64xf32, #tpu.memory_space<vmem>>, vector<1x64xf32>
    %c13 = arith.constant 13 : index
    %c0_55 = arith.constant 0 : index
    %94 = vector.load %arg4[%c13, %c0_55] : memref<24x64xf32, #tpu.memory_space<vmem>>, vector<1x64xf32>
    %c14 = arith.constant 14 : index
    %c0_56 = arith.constant 0 : index
    %95 = vector.load %arg4[%c14, %c0_56] : memref<24x64xf32, #tpu.memory_space<vmem>>, vector<1x64xf32>
    %96 = tpu.iota {dimensions = array<i32: 1>} : vector<24x16xi32>
    %97 = vector.broadcast %1 : vector<24x1xi32> to vector<24x16xi32>
    %98 = arith.cmpi eq, %97, %96 : vector<24x16xi32>
    %99 = tpu.iota {dimensions = array<i32: 1>} : vector<24x8xi32>
    %100 = vector.broadcast %0 : vector<24x1xi32> to vector<24x8xi32>
    %101 = arith.cmpi eq, %100, %99 : vector<24x8xi32>
    %102 = arith.extui %98 : vector<24x16xi1> to vector<24x16xi32>
    %103 = arith.sitofp %102 : vector<24x16xi32> to vector<24x16xf32>
    %104 = arith.truncf %103 : vector<24x16xf32> to vector<24x16xbf16>
    %105 = arith.truncf %85 : vector<16x64xf32> to vector<16x64xbf16>
    %cst_57 = arith.constant dense<0.000000e+00> : vector<24x64xf32>
    %106 = tpu.matmul %104, %105, %cst_57 {dimension_numbers = #tpu.dot_dimension_numbers<[1], [0], [0], [1], [0, 0, 1, 1], [], []>} : vector<24x16xbf16>, vector<16x64xbf16>, vector<24x64xf32> -> vector<24x64xf32>
    %107 = arith.extui %101 : vector<24x8xi1> to vector<24x8xi32>
    %108 = arith.sitofp %107 : vector<24x8xi32> to vector<24x8xf32>
    %109 = arith.truncf %108 : vector<24x8xf32> to vector<24x8xbf16>
    %110 = arith.truncf %87 : vector<8x64xf32> to vector<8x64xbf16>
    %cst_58 = arith.constant dense<0.000000e+00> : vector<24x64xf32>
    %111 = tpu.matmul %109, %110, %cst_58 {dimension_numbers = #tpu.dot_dimension_numbers<[1], [0], [0], [1], [0, 0, 1, 1], [], []>} : vector<24x8xbf16>, vector<8x64xbf16>, vector<24x64xf32> -> vector<24x64xf32>
    %112 = arith.addf %106, %111 : vector<24x64xf32>
    %113 = vector.broadcast %88 : vector<1x64xf32> to vector<24x64xf32>
    %114 = arith.addf %112, %113 : vector<24x64xf32>
    %cst_59 = arith.constant dense<0.000000e+00> : vector<24xf32>
    %115 = vector.multi_reduction <add>, %114, %cst_59 [1] : vector<24x64xf32> to vector<24xf32>
    %116 = vector.shape_cast %115 : vector<24xf32> to vector<24x1xf32>
    %cst_60 = arith.constant 6.400000e+01 : f32
    %117 = vector.broadcast %cst_60 : f32 to vector<24x1xf32>
    %118 = arith.divf %116, %117 : vector<24x1xf32>
    %119 = vector.broadcast %118 : vector<24x1xf32> to vector<24x64xf32>
    %120 = arith.subf %114, %119 : vector<24x64xf32>
    %121 = arith.mulf %120, %120 : vector<24x64xf32>
    %cst_61 = arith.constant dense<0.000000e+00> : vector<24xf32>
    %122 = vector.multi_reduction <add>, %121, %cst_61 [1] : vector<24x64xf32> to vector<24xf32>
    %123 = vector.shape_cast %122 : vector<24xf32> to vector<24x1xf32>
    %cst_62 = arith.constant 6.400000e+01 : f32
    %124 = vector.broadcast %cst_62 : f32 to vector<24x1xf32>
    %125 = arith.divf %123, %124 : vector<24x1xf32>
    %126 = vector.broadcast %118 : vector<24x1xf32> to vector<24x64xf32>
    %127 = arith.subf %114, %126 : vector<24x64xf32>
    %cst_63 = arith.constant 9.99999974E-6 : f32
    %128 = vector.broadcast %cst_63 : f32 to vector<24x1xf32>
    %129 = arith.addf %125, %128 : vector<24x1xf32>
    %130 = math.rsqrt %129 : vector<24x1xf32>
    %131 = vector.broadcast %130 : vector<24x1xf32> to vector<24x64xf32>
    %132 = arith.mulf %127, %131 : vector<24x64xf32>
    %133 = vector.broadcast %89 : vector<1x64xf32> to vector<24x64xf32>
    %134 = arith.mulf %132, %133 : vector<24x64xf32>
    %135 = vector.broadcast %90 : vector<1x64xf32> to vector<24x64xf32>
    %136 = arith.addf %134, %135 : vector<24x64xf32>
    %cst_64 = arith.constant 0.000000e+00 : f32
    %137 = vector.broadcast %cst_64 : f32 to vector<24x64xf32>
    %138 = arith.maximumf %136, %137 : vector<24x64xf32>
    %139 = tpu.iota {dimensions = array<i32: 0>} : vector<8x24xi32>
    %140 = vector.broadcast %2 : vector<1x24xi32> to vector<8x24xi32>
    %141 = arith.cmpi eq, %140, %139 : vector<8x24xi32>
    %142 = arith.extui %141 : vector<8x24xi1> to vector<8x24xi32>
    %143 = arith.sitofp %142 : vector<8x24xi32> to vector<8x24xf32>
    %cst_65 = arith.constant dense<0.000000e+00> : vector<8xf32>
    %144 = vector.multi_reduction <add>, %143, %cst_65 [1] : vector<8x24xf32> to vector<8xf32>
    %145 = vector.shape_cast %144 : vector<8xf32> to vector<8x1xf32>
    %146 = arith.extui %141 : vector<8x24xi1> to vector<8x24xi32>
    %147 = arith.sitofp %146 : vector<8x24xi32> to vector<8x24xf32>
    %148 = arith.truncf %147 : vector<8x24xf32> to vector<8x24xbf16>
    %149 = arith.truncf %138 : vector<24x64xf32> to vector<24x64xbf16>
    %cst_66 = arith.constant dense<0.000000e+00> : vector<8x64xf32>
    %150 = tpu.matmul %148, %149, %cst_66 {dimension_numbers = #tpu.dot_dimension_numbers<[1], [0], [0], [1], [0, 0, 1, 1], [], []>} : vector<8x24xbf16>, vector<24x64xbf16>, vector<8x64xf32> -> vector<8x64xf32>
    %cst_67 = arith.constant dense<0.000000e+00> : vector<8x64xf32>
    %151 = tpu.matmul %150, %91, %cst_67 {dimension_numbers = #tpu.dot_dimension_numbers<[1], [0], [0], [1], [0, 0, 1, 1], [], []>} : vector<8x64xf32>, vector<64x64xf32>, vector<8x64xf32> -> vector<8x64xf32>
    %152 = vector.broadcast %145 : vector<8x1xf32> to vector<8x64xf32>
    %153 = vector.broadcast %92 : vector<1x64xf32> to vector<8x64xf32>
    %154 = arith.mulf %152, %153 : vector<8x64xf32>
    %155 = arith.addf %151, %154 : vector<8x64xf32>
    %cst_68 = arith.constant dense<0.000000e+00> : vector<8xf32>
    %156 = vector.multi_reduction <add>, %155, %cst_68 [1] : vector<8x64xf32> to vector<8xf32>
    %157 = vector.shape_cast %156 : vector<8xf32> to vector<8x1xf32>
    %cst_69 = arith.constant 6.400000e+01 : f32
    %158 = vector.broadcast %cst_69 : f32 to vector<8x1xf32>
    %159 = arith.divf %157, %158 : vector<8x1xf32>
    %160 = vector.broadcast %159 : vector<8x1xf32> to vector<8x64xf32>
    %161 = arith.subf %155, %160 : vector<8x64xf32>
    %162 = arith.mulf %161, %161 : vector<8x64xf32>
    %cst_70 = arith.constant dense<0.000000e+00> : vector<8xf32>
    %163 = vector.multi_reduction <add>, %162, %cst_70 [1] : vector<8x64xf32> to vector<8xf32>
    %164 = vector.shape_cast %163 : vector<8xf32> to vector<8x1xf32>
    %cst_71 = arith.constant 6.400000e+01 : f32
    %165 = vector.broadcast %cst_71 : f32 to vector<8x1xf32>
    %166 = arith.divf %164, %165 : vector<8x1xf32>
    %167 = vector.broadcast %159 : vector<8x1xf32> to vector<8x64xf32>
    %168 = arith.subf %155, %167 : vector<8x64xf32>
    %cst_72 = arith.constant 9.99999974E-6 : f32
    %169 = vector.broadcast %cst_72 : f32 to vector<8x1xf32>
    %170 = arith.addf %166, %169 : vector<8x1xf32>
    %171 = math.rsqrt %170 : vector<8x1xf32>
    %172 = vector.broadcast %171 : vector<8x1xf32> to vector<8x64xf32>
    %173 = arith.mulf %168, %172 : vector<8x64xf32>
    %174 = vector.broadcast %93 : vector<1x64xf32> to vector<8x64xf32>
    %175 = arith.mulf %173, %174 : vector<8x64xf32>
    %176 = vector.broadcast %94 : vector<1x64xf32> to vector<8x64xf32>
    %177 = arith.addf %175, %176 : vector<8x64xf32>
    %cst_73 = arith.constant dense<0.000000e+00> : vector<8x64xf32>
    %178 = tpu.matmul %177, %82, %cst_73 {dimension_numbers = #tpu.dot_dimension_numbers<[1], [0], [0], [1], [0, 0, 1, 1], [], []>} : vector<8x64xf32>, vector<64x64xf32>, vector<8x64xf32> -> vector<8x64xf32>
    %cst_74 = arith.constant dense<0.000000e+00> : vector<8x64xf32>
    %179 = tpu.matmul %42, %83, %cst_74 {dimension_numbers = #tpu.dot_dimension_numbers<[1], [0], [0], [1], [0, 0, 1, 1], [], []>} : vector<8x64xf32>, vector<64x64xf32>, vector<8x64xf32> -> vector<8x64xf32>
    %180 = arith.addf %178, %179 : vector<8x64xf32>
    %181 = vector.broadcast %95 : vector<1x64xf32> to vector<8x64xf32>
    %182 = arith.addf %180, %181 : vector<8x64xf32>
    %cst_75 = arith.constant 0.000000e+00 : f32
    %183 = vector.broadcast %cst_75 : f32 to vector<8x64xf32>
    %184 = arith.maximumf %182, %183 : vector<8x64xf32>
    %c672 = arith.constant 672 : index
    %c0_76 = arith.constant 0 : index
    %185 = vector.load %arg5[%c672, %c0_76] : memref<864x64xf32, #tpu.memory_space<vmem>>, vector<64x64xf32>
    %c736 = arith.constant 736 : index
    %c0_77 = arith.constant 0 : index
    %186 = vector.load %arg5[%c736, %c0_77] : memref<864x64xf32, #tpu.memory_space<vmem>>, vector<64x64xf32>
    %c544 = arith.constant 544 : index
    %c0_78 = arith.constant 0 : index
    %187 = vector.load %arg5[%c544, %c0_78] : memref<864x64xf32, #tpu.memory_space<vmem>>, vector<64x64xf32>
    %cst_79 = arith.constant dense<0.000000e+00> : vector<8x64xf32>
    %188 = tpu.matmul %184, %187, %cst_79 {dimension_numbers = #tpu.dot_dimension_numbers<[1], [0], [0], [1], [0, 0, 1, 1], [], []>} : vector<8x64xf32>, vector<64x64xf32>, vector<8x64xf32> -> vector<8x64xf32>
    %c480 = arith.constant 480 : index
    %c0_80 = arith.constant 0 : index
    %189 = vector.load %arg5[%c480, %c0_80] : memref<864x64xf32, #tpu.memory_space<vmem>>, vector<64x64xf32>
    %cst_81 = arith.constant dense<0.000000e+00> : vector<16x64xf32>
    %190 = tpu.matmul %81, %189, %cst_81 {dimension_numbers = #tpu.dot_dimension_numbers<[1], [0], [0], [1], [0, 0, 1, 1], [], []>} : vector<16x64xf32>, vector<64x64xf32>, vector<16x64xf32> -> vector<16x64xf32>
    %c15 = arith.constant 15 : index
    %c0_82 = arith.constant 0 : index
    %191 = vector.load %arg4[%c15, %c0_82] : memref<24x64xf32, #tpu.memory_space<vmem>>, vector<1x64xf32>
    %c16 = arith.constant 16 : index
    %c0_83 = arith.constant 0 : index
    %192 = vector.load %arg4[%c16, %c0_83] : memref<24x64xf32, #tpu.memory_space<vmem>>, vector<1x64xf32>
    %c17 = arith.constant 17 : index
    %c0_84 = arith.constant 0 : index
    %193 = vector.load %arg4[%c17, %c0_84] : memref<24x64xf32, #tpu.memory_space<vmem>>, vector<1x64xf32>
    %c608 = arith.constant 608 : index
    %c0_85 = arith.constant 0 : index
    %194 = vector.load %arg5[%c608, %c0_85] : memref<864x64xf32, #tpu.memory_space<vmem>>, vector<64x64xf32>
    %c18 = arith.constant 18 : index
    %c0_86 = arith.constant 0 : index
    %195 = vector.load %arg4[%c18, %c0_86] : memref<24x64xf32, #tpu.memory_space<vmem>>, vector<1x64xf32>
    %c19 = arith.constant 19 : index
    %c0_87 = arith.constant 0 : index
    %196 = vector.load %arg4[%c19, %c0_87] : memref<24x64xf32, #tpu.memory_space<vmem>>, vector<1x64xf32>
    %c20 = arith.constant 20 : index
    %c0_88 = arith.constant 0 : index
    %197 = vector.load %arg4[%c20, %c0_88] : memref<24x64xf32, #tpu.memory_space<vmem>>, vector<1x64xf32>
    %c21 = arith.constant 21 : index
    %c0_89 = arith.constant 0 : index
    %198 = vector.load %arg4[%c21, %c0_89] : memref<24x64xf32, #tpu.memory_space<vmem>>, vector<1x64xf32>
    %199 = tpu.iota {dimensions = array<i32: 1>} : vector<24x8xi32>
    %200 = vector.broadcast %0 : vector<24x1xi32> to vector<24x8xi32>
    %201 = arith.cmpi eq, %200, %199 : vector<24x8xi32>
    %202 = tpu.iota {dimensions = array<i32: 1>} : vector<24x16xi32>
    %203 = vector.broadcast %1 : vector<24x1xi32> to vector<24x16xi32>
    %204 = arith.cmpi eq, %203, %202 : vector<24x16xi32>
    %205 = arith.extui %201 : vector<24x8xi1> to vector<24x8xi32>
    %206 = arith.sitofp %205 : vector<24x8xi32> to vector<24x8xf32>
    %207 = arith.truncf %206 : vector<24x8xf32> to vector<24x8xbf16>
    %208 = arith.truncf %188 : vector<8x64xf32> to vector<8x64xbf16>
    %cst_90 = arith.constant dense<0.000000e+00> : vector<24x64xf32>
    %209 = tpu.matmul %207, %208, %cst_90 {dimension_numbers = #tpu.dot_dimension_numbers<[1], [0], [0], [1], [0, 0, 1, 1], [], []>} : vector<24x8xbf16>, vector<8x64xbf16>, vector<24x64xf32> -> vector<24x64xf32>
    %210 = arith.extui %204 : vector<24x16xi1> to vector<24x16xi32>
    %211 = arith.sitofp %210 : vector<24x16xi32> to vector<24x16xf32>
    %212 = arith.truncf %211 : vector<24x16xf32> to vector<24x16xbf16>
    %213 = arith.truncf %190 : vector<16x64xf32> to vector<16x64xbf16>
    %cst_91 = arith.constant dense<0.000000e+00> : vector<24x64xf32>
    %214 = tpu.matmul %212, %213, %cst_91 {dimension_numbers = #tpu.dot_dimension_numbers<[1], [0], [0], [1], [0, 0, 1, 1], [], []>} : vector<24x16xbf16>, vector<16x64xbf16>, vector<24x64xf32> -> vector<24x64xf32>
    %215 = arith.addf %209, %214 : vector<24x64xf32>
    %216 = vector.broadcast %191 : vector<1x64xf32> to vector<24x64xf32>
    %217 = arith.addf %215, %216 : vector<24x64xf32>
    %cst_92 = arith.constant dense<0.000000e+00> : vector<24xf32>
    %218 = vector.multi_reduction <add>, %217, %cst_92 [1] : vector<24x64xf32> to vector<24xf32>
    %219 = vector.shape_cast %218 : vector<24xf32> to vector<24x1xf32>
    %cst_93 = arith.constant 6.400000e+01 : f32
    %220 = vector.broadcast %cst_93 : f32 to vector<24x1xf32>
    %221 = arith.divf %219, %220 : vector<24x1xf32>
    %222 = vector.broadcast %221 : vector<24x1xf32> to vector<24x64xf32>
    %223 = arith.subf %217, %222 : vector<24x64xf32>
    %224 = arith.mulf %223, %223 : vector<24x64xf32>
    %cst_94 = arith.constant dense<0.000000e+00> : vector<24xf32>
    %225 = vector.multi_reduction <add>, %224, %cst_94 [1] : vector<24x64xf32> to vector<24xf32>
    %226 = vector.shape_cast %225 : vector<24xf32> to vector<24x1xf32>
    %cst_95 = arith.constant 6.400000e+01 : f32
    %227 = vector.broadcast %cst_95 : f32 to vector<24x1xf32>
    %228 = arith.divf %226, %227 : vector<24x1xf32>
    %229 = vector.broadcast %221 : vector<24x1xf32> to vector<24x64xf32>
    %230 = arith.subf %217, %229 : vector<24x64xf32>
    %cst_96 = arith.constant 9.99999974E-6 : f32
    %231 = vector.broadcast %cst_96 : f32 to vector<24x1xf32>
    %232 = arith.addf %228, %231 : vector<24x1xf32>
    %233 = math.rsqrt %232 : vector<24x1xf32>
    %234 = vector.broadcast %233 : vector<24x1xf32> to vector<24x64xf32>
    %235 = arith.mulf %230, %234 : vector<24x64xf32>
    %236 = vector.broadcast %192 : vector<1x64xf32> to vector<24x64xf32>
    %237 = arith.mulf %235, %236 : vector<24x64xf32>
    %238 = vector.broadcast %193 : vector<1x64xf32> to vector<24x64xf32>
    %239 = arith.addf %237, %238 : vector<24x64xf32>
    %cst_97 = arith.constant 0.000000e+00 : f32
    %240 = vector.broadcast %cst_97 : f32 to vector<24x64xf32>
    %241 = arith.maximumf %239, %240 : vector<24x64xf32>
    %242 = tpu.iota {dimensions = array<i32: 0>} : vector<16x24xi32>
    %243 = vector.broadcast %3 : vector<1x24xi32> to vector<16x24xi32>
    %244 = arith.cmpi eq, %243, %242 : vector<16x24xi32>
    %245 = arith.extui %244 : vector<16x24xi1> to vector<16x24xi32>
    %246 = arith.sitofp %245 : vector<16x24xi32> to vector<16x24xf32>
    %cst_98 = arith.constant dense<0.000000e+00> : vector<16xf32>
    %247 = vector.multi_reduction <add>, %246, %cst_98 [1] : vector<16x24xf32> to vector<16xf32>
    %248 = vector.shape_cast %247 : vector<16xf32> to vector<16x1xf32>
    %249 = arith.extui %244 : vector<16x24xi1> to vector<16x24xi32>
    %250 = arith.sitofp %249 : vector<16x24xi32> to vector<16x24xf32>
    %251 = arith.truncf %250 : vector<16x24xf32> to vector<16x24xbf16>
    %252 = arith.truncf %241 : vector<24x64xf32> to vector<24x64xbf16>
    %cst_99 = arith.constant dense<0.000000e+00> : vector<16x64xf32>
    %253 = tpu.matmul %251, %252, %cst_99 {dimension_numbers = #tpu.dot_dimension_numbers<[1], [0], [0], [1], [0, 0, 1, 1], [], []>} : vector<16x24xbf16>, vector<24x64xbf16>, vector<16x64xf32> -> vector<16x64xf32>
    %cst_100 = arith.constant dense<0.000000e+00> : vector<16x64xf32>
    %254 = tpu.matmul %253, %194, %cst_100 {dimension_numbers = #tpu.dot_dimension_numbers<[1], [0], [0], [1], [0, 0, 1, 1], [], []>} : vector<16x64xf32>, vector<64x64xf32>, vector<16x64xf32> -> vector<16x64xf32>
    %255 = vector.broadcast %248 : vector<16x1xf32> to vector<16x64xf32>
    %256 = vector.broadcast %195 : vector<1x64xf32> to vector<16x64xf32>
    %257 = arith.mulf %255, %256 : vector<16x64xf32>
    %258 = arith.addf %254, %257 : vector<16x64xf32>
    %cst_101 = arith.constant dense<0.000000e+00> : vector<16xf32>
    %259 = vector.multi_reduction <add>, %258, %cst_101 [1] : vector<16x64xf32> to vector<16xf32>
    %260 = vector.shape_cast %259 : vector<16xf32> to vector<16x1xf32>
    %cst_102 = arith.constant 6.400000e+01 : f32
    %261 = vector.broadcast %cst_102 : f32 to vector<16x1xf32>
    %262 = arith.divf %260, %261 : vector<16x1xf32>
    %263 = vector.broadcast %262 : vector<16x1xf32> to vector<16x64xf32>
    %264 = arith.subf %258, %263 : vector<16x64xf32>
    %265 = arith.mulf %264, %264 : vector<16x64xf32>
    %cst_103 = arith.constant dense<0.000000e+00> : vector<16xf32>
    %266 = vector.multi_reduction <add>, %265, %cst_103 [1] : vector<16x64xf32> to vector<16xf32>
    %267 = vector.shape_cast %266 : vector<16xf32> to vector<16x1xf32>
    %cst_104 = arith.constant 6.400000e+01 : f32
    %268 = vector.broadcast %cst_104 : f32 to vector<16x1xf32>
    %269 = arith.divf %267, %268 : vector<16x1xf32>
    %270 = vector.broadcast %262 : vector<16x1xf32> to vector<16x64xf32>
    %271 = arith.subf %258, %270 : vector<16x64xf32>
    %cst_105 = arith.constant 9.99999974E-6 : f32
    %272 = vector.broadcast %cst_105 : f32 to vector<16x1xf32>
    %273 = arith.addf %269, %272 : vector<16x1xf32>
    %274 = math.rsqrt %273 : vector<16x1xf32>
    %275 = vector.broadcast %274 : vector<16x1xf32> to vector<16x64xf32>
    %276 = arith.mulf %271, %275 : vector<16x64xf32>
    %277 = vector.broadcast %196 : vector<1x64xf32> to vector<16x64xf32>
    %278 = arith.mulf %276, %277 : vector<16x64xf32>
    %279 = vector.broadcast %197 : vector<1x64xf32> to vector<16x64xf32>
    %280 = arith.addf %278, %279 : vector<16x64xf32>
    %cst_106 = arith.constant dense<0.000000e+00> : vector<16x64xf32>
    %281 = tpu.matmul %280, %185, %cst_106 {dimension_numbers = #tpu.dot_dimension_numbers<[1], [0], [0], [1], [0, 0, 1, 1], [], []>} : vector<16x64xf32>, vector<64x64xf32>, vector<16x64xf32> -> vector<16x64xf32>
    %cst_107 = arith.constant dense<0.000000e+00> : vector<16x64xf32>
    %282 = tpu.matmul %81, %186, %cst_107 {dimension_numbers = #tpu.dot_dimension_numbers<[1], [0], [0], [1], [0, 0, 1, 1], [], []>} : vector<16x64xf32>, vector<64x64xf32>, vector<16x64xf32> -> vector<16x64xf32>
    %283 = arith.addf %281, %282 : vector<16x64xf32>
    %284 = vector.broadcast %198 : vector<1x64xf32> to vector<16x64xf32>
    %285 = arith.addf %283, %284 : vector<16x64xf32>
    %cst_108 = arith.constant 0.000000e+00 : f32
    %286 = vector.broadcast %cst_108 : f32 to vector<16x64xf32>
    %287 = arith.maximumf %285, %286 : vector<16x64xf32>
    %c800 = arith.constant 800 : index
    %c0_109 = arith.constant 0 : index
    %288 = vector.load %arg5[%c800, %c0_109] : memref<864x64xf32, #tpu.memory_space<vmem>>, vector<64x64xf32>
    %cst_110 = arith.constant dense<0.000000e+00> : vector<16x64xf32>
    %289 = tpu.matmul %287, %288, %cst_110 {dimension_numbers = #tpu.dot_dimension_numbers<[1], [0], [0], [1], [0, 0, 1, 1], [], []>} : vector<16x64xf32>, vector<64x64xf32>, vector<16x64xf32> -> vector<16x64xf32>
    %c22 = arith.constant 22 : index
    %c0_111 = arith.constant 0 : index
    %290 = vector.load %arg4[%c22, %c0_111] : memref<24x64xf32, #tpu.memory_space<vmem>>, vector<1x64xf32>
    %291 = vector.broadcast %290 : vector<1x64xf32> to vector<16x64xf32>
    %292 = arith.addf %289, %291 : vector<16x64xf32>
    %cst_112 = arith.constant 0.000000e+00 : f32
    %293 = vector.broadcast %cst_112 : f32 to vector<16x64xf32>
    %294 = arith.maximumf %292, %293 : vector<16x64xf32>
    %c23 = arith.constant 23 : index
    %c0_113 = arith.constant 0 : index
    %295 = vector.load %arg4[%c23, %c0_113] : memref<24x64xf32, #tpu.memory_space<vmem>>, vector<1x64xf32>
    %cst_114 = arith.constant dense<0.000000e+00> : vector<1x16xf32>
    %296 = tpu.matmul %295, %294, %cst_114 {dimension_numbers = #tpu.dot_dimension_numbers<[1], [1], [0], [0], [0, 0, 1, 0], [], []>} : vector<1x64xf32>, vector<16x64xf32>, vector<1x16xf32> -> vector<1x16xf32>
    %c0_115 = arith.constant 0 : index
    %c0_116 = arith.constant 0 : index
    %297 = vector.load %arg6[%c0_115, %c0_116] : memref<1x16xf32, #tpu.memory_space<vmem>>, vector<1x16xf32>
    tpu.vector_store %arg6[%c0_115, %c0_116], %296 {strides = array<i32>} : memref<1x16xf32, #tpu.memory_space<vmem>>, vector<1x16xf32>,
    return
  }
}

</mosaic_0001>

<llo_original>
// kernel: gnn2_forward.1
$region0: #{gnn2_forward.1}
  #allocation0 [shape = 'u32[]', space=smem, size = 0x4, offset = 0x4, fixed_abs, tag = 'smem constant byte address 0x4 - core index']
  #allocation1 [shape = 'u32[72,128]{1,0:T(1,128)}', space=vmem, size = 0x9000, scoped, tag = 'internal scratch']
  %s0 = inlined_call_operand.vmem [shape: f32[8,5], index: 0, kind: input, shape index: {}]
  %s1 = inlined_call_operand.vmem [shape: f32[16,19], index: 1, kind: input, shape index: {}]
  %s2 = inlined_call_operand.vmem [shape: s32[24,2], index: 2, kind: input, shape index: {}]
  %s3 = inlined_call_operand.vmem [shape: s32[2,24], index: 3, kind: input, shape index: {}]
  %s4 = inlined_call_operand.vmem [shape: f32[24,64], index: 4, kind: input, shape index: {}]
  %s5 = inlined_call_operand.vmem [shape: f32[864,64], index: 5, kind: input, shape index: {}]
  %s6 = inlined_call_operand.hbm [shape: f32[1,16], index: 6, kind: output, shape index: {}]
  %s7 = sld [smem:[#allocation0]]
  $region34: #{gnn2_forward.1} parent=0
    _
  %s9 = ssub.s32 1, %s7
  %s10 = scalar_select 0, %s9, %s7
  $region1: #{gnn2_forward.1} parent=0
    #allocation2 [shape = 'u8[512]{0}', space=vmem, size = 0x400, scoped, tag = 'output window, operand 0, single buffered']
    #allocation3 [shape = 's32[1]{0}', space=sflag, size = 0x4, scoped, tag = 'scoped memory for gnn2_forward.1']
    %11 = vsyncpa [#allocation3], 0
    // Predicated region
    $region2: #{gnn2_forward.1} parent=1 // pred_check
      _
    $region3: #{gnn2_forward.1} parent=1 // pred_check_branch
      %13 = sbr.rel (0) target = $region5
    $region4: #{gnn2_forward.1} parent=1 // pred_region
      _
    $region5: #{gnn2_forward.1} parent=1 // pred_fallthru
      _
    // Predicated region
    $region6: #{gnn2_forward.1} parent=1 // pred_check
      _
    $region7: #{gnn2_forward.1} parent=1 // pred_check_branch
      %15 = sbr.rel (0) target = $region9
    $region8: #{gnn2_forward.1} parent=1 // pred_region
      _
    $region9: #{gnn2_forward.1} parent=1 // pred_fallthru
      _
    // Predicated region
    $region10: #{gnn2_forward.1} parent=1 // pred_check
      _
    $region11: #{gnn2_forward.1} parent=1 // pred_check_branch
      %17 = sbr.rel (0) target = $region13
    $region12: #{gnn2_forward.1} parent=1 // pred_region
      _
    $region13: #{gnn2_forward.1} parent=1 // pred_fallthru
      _
    // Predicated region
    $region14: #{gnn2_forward.1} parent=1 // pred_check
      _
    $region15: #{gnn2_forward.1} parent=1 // pred_check_branch
      %19 = sbr.rel (0) target = $region17
    $region16: #{gnn2_forward.1} parent=1 // pred_region
      _
    $region17: #{gnn2_forward.1} parent=1 // pred_fallthru
      _
    // Predicated region
    $region18: #{gnn2_forward.1} parent=1 // pred_check
      _
    $region19: #{gnn2_forward.1} parent=1 // pred_check_branch
      %21 = sbr.rel (0) target = $region21
    $region20: #{gnn2_forward.1} parent=1 // pred_region
      _
    $region21: #{gnn2_forward.1} parent=1 // pred_fallthru
      _
    // Predicated region
    $region22: #{gnn2_forward.1} parent=1 // pred_check
      _
    $region23: #{gnn2_forward.1} parent=1 // pred_check_branch
      %23 = sbr.rel (0) target = $region25
    $region24: #{gnn2_forward.1} parent=1 // pred_region
      _
    $region25: #{gnn2_forward.1} parent=1 // pred_fallthru
      _
    %v25 = vld [vmem:[%s2] sm:$0xff]
    %v26 = vld [vmem:[%s2 + $0x8] sm:$0xff]
    %v27 = vld [vmem:[%s2 + $0x10] sm:$0xff]
    %v28 = vld [vmem:[%s3] sm:$0x1]
    %v29 = vld [vmem:[%s3 + $0x1] sm:$0x1]
    %v30 = vld [vmem:[%s0] sm:$0xff]
    %v31 = vld [vmem:[%s4] sm:$0x1]
    %v32 = vld [vmem:[%s4 + $0x1] sm:$0x1]
    %v33 = vld [vmem:[%s5] sm:$0x1f]
    %v34 = vld [vmem:[%s4 + $0x2] sm:$0x1]
    %v35 = vld [vmem:[%s5 + $0x20] sm:$0xff]
    %v36 = vld [vmem:[%s5 + $0x28] sm:$0xff]
    %v37 = vld [vmem:[%s5 + $0x30] sm:$0xff]
    %v38 = vld [vmem:[%s5 + $0x38] sm:$0xff]
    %v39 = vld [vmem:[%s5 + $0x40] sm:$0xff]
    %v40 = vld [vmem:[%s5 + $0x48] sm:$0xff]
    %v41 = vld [vmem:[%s5 + $0x50] sm:$0xff]
    %v42 = vld [vmem:[%s5 + $0x58] sm:$0xff]
    %v43 = vld [vmem:[%s4 + $0x3] sm:$0x1]
    %vm44 = vcmask 39936
    %v45 = vsel %vm44, %v30, 0.0
    %46 = vadd.xlane.f32.xlu0 %v45
    %v47 = vpop.xlane.xlu0 %46
    %v48 = vrcp.pop 5.0
    %v49 = vmul.f32 5.0, %v48
    %v50 = vsub.f32 1.0, %v49
    %v51 = vmul.f32 %v48, %v50
    %v52 = vadd.f32 %v48, %v51
    %vm53 = vweird.f32 %v48
    %v54 = vsel %vm53, %v48, %v52
    %v55 = vmul.f32 %v47, %v54
    %v56 = vsub.f32 %v30, %v55
    %v57 = vmul.f32 %v56, %v56
    %v58 = vsel %vm44, %v57, 0.0
    %59 = vadd.xlane.f32.xlu0 %v58
    %v60 = vpop.xlane.xlu0 %59
    %v61 = vmul.f32 %v60, %v54
    %v62 = vadd.f32 %v61, 1e-05
    %v63 = vrsqrt.pop %v62
    %v64 = vmul.f32 %v63, %v62
    %v65 = vmul.f32 %v64, %v63
    %v66 = vmul.f32 0.5, %v65
    %v67 = vsub.f32 1.5, %v66
    %v68 = vmul.f32 %v63, %v67
    %vm69 = vweird.f32 %v62
    %vm70 = vweird.f32 %v63
    %vm71 = vmor %vm69, %vm70
    %v72 = vsel %vm71, %v63, %v68
    %v73 = vmul.f32 %v56, %v72
    %v74 = vperm.slane %v31, 0
    %v75 = vmul.f32 %v73, %v74
    %v76 = vperm.slane %v32, 0
    %v77 = vadd.f32 %v75, %v76
    %v78 = vperm.slane %v34, 0
    %v80 = vsel %vm44, %v77, 0
    %vm82 = vcmask 1044480
    %v84 = vsel %vm82, %v33, 0
    %86 = vmatpush.msra.mxu0 0.0
    %87 = vmatpush.msra.mxu0 0.0
    %88 = vmatpush.msra.mxu0 0.0
    %89 = vmatpush.msra.mxu0 0.0
    %90 = vmatpush.msra.mxu0 0.0
    %91 = vmatpush.msra.mxu0 0.0
    %92 = vmatpush.msra.mxu0 0.0
    %93 = vmatpush.msra.mxu0 0.0
    %94 = vmatpush.msra.mxu0 0.0
    %95 = vmatpush.msra.mxu0 0.0
    %96 = vmatpush.msra.mxu0 0.0
    %97 = vmatpush.msra.mxu0 0.0
    %98 = vmatpush.msra.mxu0 0.0
    %99 = vmatpush.msra.mxu0 0.0
    %100 = vmatpush.msra.mxu0 0.0
    %101 = vmatpush.msra.mxu0 %v84
    %102 = vmatmul.f32.gmra.mxu0 %v80
    %v103 = vpop.f32.mrf.mxu0
    %v104 = vadd.f32 %v78, %v103
    %105 = vdwg.mxu0
    %v106 = vmax.f32 %v104, 0.0
    %v107 = vperm.slane %v43, 0
    %vm108 = vcmask 523264
    %v110 = vsel %vm108, %v106, 0
    %112 = vmatpush.msra.mxu0 0.0
    %113 = vmatpush.msra.mxu0 0.0
    %114 = vmatpush.msra.mxu0 0.0
    %115 = vmatpush.msra.mxu0 0.0
    %116 = vmatpush.msra.mxu0 0.0
    %117 = vmatpush.msra.mxu0 0.0
    %118 = vmatpush.msra.mxu0 0.0
    %119 = vmatpush.msra.mxu0 0.0
    %120 = vmatpush.msra.mxu0 %v42
    %121 = vmatpush.msra.mxu0 %v41
    %122 = vmatpush.msra.mxu0 %v40
    %123 = vmatpush.msra.mxu0 %v39
    %124 = vmatpush.msra.mxu0 %v38
    %125 = vmatpush.msra.mxu0 %v37
    %126 = vmatpush.msra.mxu0 %v36
    %127 = vmatpush.msra.mxu0 %v35
    %128 = vmatmul.f32.gmra.mxu0 %v110
    %v129 = vpop.f32.mrf.mxu0
    %v130 = vadd.f32 %v107, %v129
    %131 = vdwg.mxu0
    %v132 = vmax.f32 %v130, 0.0
    %v133 = vld [vmem:[%s1] sm:$0xff]
    %v134 = vld [vmem:[%s1 + $0x8] sm:$0xff]
    %v135 = vld [vmem:[%s4 + $0x4] sm:$0x1]
    %v136 = vld [vmem:[%s4 + $0x5] sm:$0x1]
    %v137 = vld [vmem:[%s5 + $0x8] sm:$0xff]
    %v138 = vld [vmem:[%s5 + $0x10] sm:$0xff]
    %v139 = vld [vmem:[%s5 + $0x18] sm:$0x7]
    %v140 = vld [vmem:[%s4 + $0x6] sm:$0x1]
    %v141 = vld [vmem:[%s5 + $0x60] sm:$0xff]
    %v142 = vld [vmem:[%s5 + $0x68] sm:$0xff]
    %v143 = vld [vmem:[%s5 + $0x70] sm:$0xff]
    %v144 = vld [vmem:[%s5 + $0x78] sm:$0xff]
    %v145 = vld [vmem:[%s5 + $0x80] sm:$0xff]
    %v146 = vld [vmem:[%s5 + $0x88] sm:$0xff]
    %v147 = vld [vmem:[%s5 + $0x90] sm:$0xff]
    %v148 = vld [vmem:[%s5 + $0x98] sm:$0xff]
    %v149 = vld [vmem:[%s4 + $0x7] sm:$0x1]
    %vm150 = vcmask 154624
    %v151 = vsel %vm150, %v133, 0.0
    %152 = vadd.xlane.f32.xlu0 %v151
    %v153 = vpop.xlane.xlu0 %152
    %v154 = vsel %vm150, %v134, 0.0
    %155 = vadd.xlane.f32.xlu0 %v154
    %v156 = vpop.xlane.xlu0 %155
    %v157 = vrcp.pop 19.0
    %v158 = vmul.f32 19.0, %v157
    %v159 = vsub.f32 1.0, %v158
    %v160 = vmul.f32 %v157, %v159
    %v161 = vadd.f32 %v157, %v160
    %vm162 = vweird.f32 %v157
    %v163 = vsel %vm162, %v157, %v161
    %v164 = vmul.f32 %v153, %v163
    %v165 = vmul.f32 %v156, %v163
    %v166 = vsub.f32 %v133, %v164
    %v167 = vsub.f32 %v134, %v165
    %v168 = vmul.f32 %v166, %v166
    %v169 = vmul.f32 %v167, %v167
    %v170 = vsel %vm150, %v168, 0.0
    %171 = vadd.xlane.f32.xlu0 %v170
    %v172 = vpop.xlane.xlu0 %171
    %v173 = vsel %vm150, %v169, 0.0
    %174 = vadd.xlane.f32.xlu0 %v173
    %v175 = vpop.xlane.xlu0 %174
    %v176 = vmul.f32 %v172, %v163
    %v177 = vmul.f32 %v175, %v163
    %v178 = vadd.f32 %v176, 1e-05
    %v179 = vadd.f32 %v177, 1e-05
    %v180 = vrsqrt.pop %v178
    %v181 = vmul.f32 %v180, %v178
    %v182 = vmul.f32 %v181, %v180
    %v183 = vmul.f32 0.5, %v182
    %v184 = vsub.f32 1.5, %v183
    %v185 = vmul.f32 %v180, %v184
    %vm186 = vweird.f32 %v178
    %vm187 = vweird.f32 %v180
    %vm188 = vmor %vm186, %vm187
    %v189 = vsel %vm188, %v180, %v185
    %v190 = vrsqrt.pop %v179
    %v191 = vmul.f32 %v190, %v179
    %v192 = vmul.f32 %v191, %v190
    %v193 = vmul.f32 0.5, %v192
    %v194 = vsub.f32 1.5, %v193
    %v195 = vmul.f32 %v190, %v194
    %vm196 = vweird.f32 %v179
    %vm197 = vweird.f32 %v190
    %vm198 = vmor %vm196, %vm197
    %v199 = vsel %vm198, %v190, %v195
    %v200 = vmul.f32 %v166, %v189
    %v201 = vmul.f32 %v167, %v199
    %v202 = vperm.slane %v135, 0
    %v203 = vmul.f32 %v200, %v202
    %v204 = vmul.f32 %v201, %v202
    %v205 = vperm.slane %v136, 0
    %v206 = vadd.f32 %v203, %v205
    %v207 = vadd.f32 %v204, %v205
    %v208 = vperm.slane %v140, 0
    %v210 = vsel %vm150, %v206, 0
    %v213 = vsel %vm150, %v207, 0
    %vm215 = vcmask 1042432
    %v217 = vsel %vm215, %v139, 0
    %219 = vmatpush.msra.mxu0 0.0
    %220 = vmatpush.msra.mxu0 0.0
    %221 = vmatpush.msra.mxu0 0.0
    %222 = vmatpush.msra.mxu0 0.0
    %223 = vmatpush.msra.mxu0 0.0
    %224 = vmatpush.msra.mxu0 0.0
    %225 = vmatpush.msra.mxu0 0.0
    %226 = vmatpush.msra.mxu0 0.0
    %227 = vmatpush.msra.mxu0 0.0
    %228 = vmatpush.msra.mxu0 0.0
    %229 = vmatpush.msra.mxu0 0.0
    %230 = vmatpush.msra.mxu0 0.0
    %231 = vmatpush.msra.mxu0 0.0
    %232 = vmatpush.msra.mxu0 %v217
    %233 = vmatpush.msra.mxu0 %v138
    %234 = vmatpush.msra.mxu0 %v137
    %235 = vmatmul.f32.gmra.mxu0 %v210
    %v236 = vpop.f32.mrf.mxu0
    %v237 = vadd.f32 %v208, %v236
    %238 = vmatmul.f32.gmra.mxu0 %v213
    %v239 = vpop.f32.mrf.mxu0
    %v240 = vadd.f32 %v208, %v239
    %241 = vdwg.mxu0
    %v242 = vmax.f32 %v237, 0.0
    %v243 = vmax.f32 %v240, 0.0
    %v244 = vperm.slane %v149, 0
    %v246 = vsel %vm108, %v242, 0
    %v249 = vsel %vm108, %v243, 0
    %251 = vmatpush.msra.mxu0 0.0
    %252 = vmatpush.msra.mxu0 0.0
    %253 = vmatpush.msra.mxu0 0.0
    %254 = vmatpush.msra.mxu0 0.0
    %255 = vmatpush.msra.mxu0 0.0
    %256 = vmatpush.msra.mxu0 0.0
    %257 = vmatpush.msra.mxu0 0.0
    %258 = vmatpush.msra.mxu0 0.0
    %259 = vmatpush.msra.mxu0 %v148
    %260 = vmatpush.msra.mxu0 %v147
    %261 = vmatpush.msra.mxu0 %v146
    %262 = vmatpush.msra.mxu0 %v145
    %263 = vmatpush.msra.mxu0 %v144
    %264 = vmatpush.msra.mxu0 %v143
    %265 = vmatpush.msra.mxu0 %v142
    %266 = vmatpush.msra.mxu0 %v141
    %267 = vmatmul.f32.gmra.mxu0 %v246
    %v268 = vpop.f32.mrf.mxu0
    %v269 = vadd.f32 %v244, %v268
    %270 = vmatmul.f32.gmra.mxu0 %v249
    %v271 = vpop.f32.mrf.mxu0
    %v272 = vadd.f32 %v244, %v271
    %273 = vdwg.mxu0
    %v274 = vmax.f32 %v269, 0.0
    %v275 = vmax.f32 %v272, 0.0
    %v276 = vld [vmem:[%s5 + $0x160] sm:$0xff]
    %v277 = vld [vmem:[%s5 + $0x168] sm:$0xff]
    %v278 = vld [vmem:[%s5 + $0x170] sm:$0xff]
    %v279 = vld [vmem:[%s5 + $0x178] sm:$0xff]
    %v280 = vld [vmem:[%s5 + $0x180] sm:$0xff]
    %v281 = vld [vmem:[%s5 + $0x188] sm:$0xff]
    %v282 = vld [vmem:[%s5 + $0x190] sm:$0xff]
    %v283 = vld [vmem:[%s5 + $0x198] sm:$0xff]
    %v284 = vld [vmem:[%s5 + $0x1a0] sm:$0xff]
    %v285 = vld [vmem:[%s5 + $0x1a8] sm:$0xff]
    %v286 = vld [vmem:[%s5 + $0x1b0] sm:$0xff]
    %v287 = vld [vmem:[%s5 + $0x1b8] sm:$0xff]
    %v288 = vld [vmem:[%s5 + $0x1c0] sm:$0xff]
    %v289 = vld [vmem:[%s5 + $0x1c8] sm:$0xff]
    %v290 = vld [vmem:[%s5 + $0x1d0] sm:$0xff]
    %v291 = vld [vmem:[%s5 + $0x1d8] sm:$0xff]
    %v292 = vld [vmem:[%s5 + $0xe0] sm:$0xff]
    %v293 = vld [vmem:[%s5 + $0xe8] sm:$0xff]
    %v294 = vld [vmem:[%s5 + $0xf0] sm:$0xff]
    %v295 = vld [vmem:[%s5 + $0xf8] sm:$0xff]
    %v296 = vld [vmem:[%s5 + $0x100] sm:$0xff]
    %v297 = vld [vmem:[%s5 + $0x108] sm:$0xff]
    %v298 = vld [vmem:[%s5 + $0x110] sm:$0xff]
    %v299 = vld [vmem:[%s5 + $0x118] sm:$0xff]
    %v301 = vsel %vm108, %v274, 0
    %v304 = vsel %vm108, %v275, 0
    %306 = vmatpush.msra.mxu0 0.0
    %307 = vmatpush.msra.mxu0 0.0
    %308 = vmatpush.msra.mxu0 0.0
    %309 = vmatpush.msra.mxu0 0.0
    %310 = vmatpush.msra.mxu0 0.0
    %311 = vmatpush.msra.mxu0 0.0
    %312 = vmatpush.msra.mxu0 0.0
    %313 = vmatpush.msra.mxu0 0.0
    %314 = vmatpush.msra.mxu0 %v299
    %315 = vmatpush.msra.mxu0 %v298
    %316 = vmatpush.msra.mxu0 %v297
    %317 = vmatpush.msra.mxu0 %v296
    %318 = vmatpush.msra.mxu0 %v295
    %319 = vmatpush.msra.mxu0 %v294
    %320 = vmatpush.msra.mxu0 %v293
    %321 = vmatpush.msra.mxu0 %v292
    %322 = vmatmul.f32.gmra.mxu0 %v301
    %v323 = vpop.f32.mrf.mxu0
    %v324 = vadd.f32 0.0, %v323
    %325 = vmatmul.f32.gmra.mxu0 %v304
    %v326 = vpop.f32.mrf.mxu0
    %v327 = vadd.f32 0.0, %v326
    %328 = vdwg.mxu0
    %v329 = vld [vmem:[%s5 + $0xa0] sm:$0xff]
    %v330 = vld [vmem:[%s5 + $0xa8] sm:$0xff]
    %v331 = vld [vmem:[%s5 + $0xb0] sm:$0xff]
    %v332 = vld [vmem:[%s5 + $0xb8] sm:$0xff]
    %v333 = vld [vmem:[%s5 + $0xc0] sm:$0xff]
    %v334 = vld [vmem:[%s5 + $0xc8] sm:$0xff]
    %v335 = vld [vmem:[%s5 + $0xd0] sm:$0xff]
    %v336 = vld [vmem:[%s5 + $0xd8] sm:$0xff]
    %v338 = vsel %vm108, %v132, 0
    %340 = vmatpush.msra.mxu0 0.0
    %341 = vmatpush.msra.mxu0 0.0
    %342 = vmatpush.msra.mxu0 0.0
    %343 = vmatpush.msra.mxu0 0.0
    %344 = vmatpush.msra.mxu0 0.0
    %345 = vmatpush.msra.mxu0 0.0
    %346 = vmatpush.msra.mxu0 0.0
    %347 = vmatpush.msra.mxu0 0.0
    %348 = vmatpush.msra.mxu0 %v336
    %349 = vmatpush.msra.mxu0 %v335
    %350 = vmatpush.msra.mxu0 %v334
    %351 = vmatpush.msra.mxu0 %v333
    %352 = vmatpush.msra.mxu0 %v332
    %353 = vmatpush.msra.mxu0 %v331
    %354 = vmatpush.msra.mxu0 %v330
    %355 = vmatpush.msra.mxu0 %v329
    %356 = vmatmul.f32.gmra.mxu0 %v338
    %v357 = vpop.f32.mrf.mxu0
    %v358 = vadd.f32 0.0, %v357
    %359 = vdwg.mxu0
    %v360 = vld [vmem:[%s4 + $0x8] sm:$0x1]
    %v361 = vld [vmem:[%s4 + $0x9] sm:$0x1]
    %v362 = vld [vmem:[%s4 + $0xa] sm:$0x1]
    %v363 = vld [vmem:[%s5 + $0x120] sm:$0xff]
    %v364 = vld [vmem:[%s5 + $0x128] sm:$0xff]
    %v365 = vld [vmem:[%s5 + $0x130] sm:$0xff]
    %v366 = vld [vmem:[%s5 + $0x138] sm:$0xff]
    %v367 = vld [vmem:[%s5 + $0x140] sm:$0xff]
    %v368 = vld [vmem:[%s5 + $0x148] sm:$0xff]
    %v369 = vld [vmem:[%s5 + $0x150] sm:$0xff]
    %v370 = vld [vmem:[%s5 + $0x158] sm:$0xff]
    %v371 = vld [vmem:[%s4 + $0xb] sm:$0x1]
    %v372 = vld [vmem:[%s4 + $0xc] sm:$0x1]
    %v373 = vld [vmem:[%s4 + $0xd] sm:$0x1]
    %v374 = vld [vmem:[%s4 + $0xe] sm:$0x1]
    %v375 = vlaneseq
    %v376 = vand.u32 %v375, 127
    %377 = vset.pattern.permute.xlu0 1
    %378 = vperm.xlu0 %377, %v25
    %v379 = vpop.permute.xlu0 %378
    %380 = vset.pattern.permute.xlu0 1
    %381 = vperm.xlu0 %380, %v26
    %v382 = vpop.permute.xlu0 %381
    %383 = vset.pattern.permute.xlu0 1
    %384 = vperm.xlu0 %383, %v27
    %v385 = vpop.permute.xlu0 %384
    %vm386 = vcmp.eq.s32.totalorder %v379, %v376
    %vm387 = vcmp.eq.s32.totalorder %v382, %v376
    %vm388 = vcmp.eq.s32.totalorder %v385, %v376
    %389 = vset.pattern.permute.xlu0 0
    %390 = vperm.xlu0 %389, %v25
    %v391 = vpop.permute.xlu0 %390
    %392 = vset.pattern.permute.xlu0 0
    %393 = vperm.xlu0 %392, %v26
    %v394 = vpop.permute.xlu0 %393
    %395 = vset.pattern.permute.xlu0 0
    %396 = vperm.xlu0 %395, %v27
    %v397 = vpop.permute.xlu0 %396
    %vm398 = vcmp.eq.s32.totalorder %v391, %v376
    %vm399 = vcmp.eq.s32.totalorder %v394, %v376
    %vm400 = vcmp.eq.s32.totalorder %v397, %v376
    %v401 = vsel %vm386, 1, 0
    %v402 = vsel %vm387, 1, 0
    %v403 = vsel %vm388, 1, 0
    %v404 = vcvt.s32.f32 %v401
    %v405 = vcvt.s32.f32 %v402
    %v406 = vcvt.s32.f32 %v403
    %v407 = vpack.c.bf16 %v405, %v404
    %v408 = vpack.c.bf16 %v406, %v406
    %v409 = vpack.c.bf16 %v327, %v324
    %v410 = vsel %vm398, 1, 0
    %v411 = vsel %vm399, 1, 0
    %v412 = vsel %vm400, 1, 0
    %v413 = vcvt.s32.f32 %v410
    %v414 = vcvt.s32.f32 %v411
    %v415 = vcvt.s32.f32 %v412
    %v416 = vpack.c.bf16 %v414, %v413
    %v417 = vpack.c.bf16 %v415, %v415
    %v418 = vpack.c.bf16 %v358, %v358
    %vm419 = vcmask 64512
    %v421 = vsel %vm419, %v416, 0
    %v424 = vsel %vm419, %v417, 0
    %vm426 = vcmask 1043456
    %v428 = vsel %vm426, %v418, 0
    %430 = vmatpush.bf16.msra.mxu0 0
    %431 = vmatpush.bf16.msra.mxu0 0
    %432 = vmatpush.bf16.msra.mxu0 0
    %433 = vmatpush.bf16.msra.mxu0 0
    %434 = vmatpush.bf16.msra.mxu0 0
    %435 = vmatpush.bf16.msra.mxu0 0
    %436 = vmatpush.bf16.msra.mxu0 0
    %437 = vmatpush.bf16.msra.mxu0 %v428
    %438 = vmatmul.bf16.gmra.mxu0 %v421
    %v439 = vpop.f32.mrf.mxu0
    %v440 = vadd.f32 0.0, %v439
    %v441 = vpop.f32.mrf.mxu0
    %v442 = vadd.f32 0.0, %v441
    %443 = vmatmul.bf16.gmra.mxu0 %v424
    %v444 = vpop.f32.mrf.mxu0
    %v445 = vadd.f32 0.0, %v444
    %v446 = vpop.f32.mrf.mxu0
    %447 = vdwg.mxu0
    %vm448 = vcmask 130048
    %v450 = vsel %vm448, %v407, 0
    %v453 = vsel %vm448, %v408, 0
    %455 = vmatpush.bf16.msra.mxu0 0
    %456 = vmatpush.bf16.msra.mxu0 0
    %457 = vmatpush.bf16.msra.mxu0 0
    %458 = vmatpush.bf16.msra.mxu0 0
    %459 = vmatpush.bf16.msra.mxu0 0
    %460 = vmatpush.bf16.msra.mxu0 0
    %461 = vmatpush.bf16.msra.mxu0 0
    %462 = vmatpush.bf16.msra.mxu0 %v409
    %463 = vmatmul.bf16.gmra.mxu0 %v450
    %v464 = vpop.f32.mrf.mxu0
    %v465 = vadd.f32 %v440, %v464
    %v466 = vpop.f32.mrf.mxu0
    %v467 = vadd.f32 %v442, %v466
    %468 = vmatmul.bf16.gmra.mxu0 %v453
    %v469 = vpop.f32.mrf.mxu0
    %v470 = vadd.f32 %v445, %v469
    %v471 = vpop.f32.mrf.mxu0
    %472 = vdwg.mxu0
    %v473 = vperm.slane %v360, 0
    %v474 = vadd.f32 %v465, %v473
    %v475 = vadd.f32 %v467, %v473
    %v476 = vadd.f32 %v470, %v473
    %v477 = vsel %vm108, %v474, 0.0
    %478 = vadd.xlane.f32.xlu0 %v477
    %v479 = vpop.xlane.xlu0 %478
    %v480 = vsel %vm108, %v475, 0.0
    %481 = vadd.xlane.f32.xlu0 %v480
    %v482 = vpop.xlane.xlu0 %481
    %v483 = vsel %vm108, %v476, 0.0
    %484 = vadd.xlane.f32.xlu0 %v483
    %v485 = vpop.xlane.xlu0 %484
    %v486 = vrcp.pop 64.0
    %v487 = vmul.f32 64.0, %v486
    %v488 = vsub.f32 1.0, %v487
    %v489 = vmul.f32 %v486, %v488
    %v490 = vadd.f32 %v486, %v489
    %vm491 = vweird.f32 %v486
    %v492 = vsel %vm491, %v486, %v490
    %v493 = vmul.f32 %v479, %v492
    %v494 = vmul.f32 %v482, %v492
    %v495 = vmul.f32 %v485, %v492
    %v496 = vsub.f32 %v474, %v493
    %v497 = vsub.f32 %v475, %v494
    %v498 = vsub.f32 %v476, %v495
    %v499 = vmul.f32 %v496, %v496
    %v500 = vmul.f32 %v497, %v497
    %v501 = vmul.f32 %v498, %v498
    %v502 = vsel %vm108, %v499, 0.0
    %503 = vadd.xlane.f32.xlu0 %v502
    %v504 = vpop.xlane.xlu0 %503
    %v505 = vsel %vm108, %v500, 0.0
    %506 = vadd.xlane.f32.xlu0 %v505
    %v507 = vpop.xlane.xlu0 %506
    %v508 = vsel %vm108, %v501, 0.0
    %509 = vadd.xlane.f32.xlu0 %v508
    %v510 = vpop.xlane.xlu0 %509
    %v511 = vmul.f32 %v504, %v492
    %v512 = vmul.f32 %v507, %v492
    %v513 = vmul.f32 %v510, %v492
    %v514 = vadd.f32 %v511, 1e-05
    %v515 = vadd.f32 %v512, 1e-05
    %v516 = vadd.f32 %v513, 1e-05
    %v517 = vrsqrt.pop %v514
    %v518 = vmul.f32 %v517, %v514
    %v519 = vmul.f32 %v518, %v517
    %v520 = vmul.f32 0.5, %v519
    %v521 = vsub.f32 1.5, %v520
    %v522 = vmul.f32 %v517, %v521
    %vm523 = vweird.f32 %v514
    %vm524 = vweird.f32 %v517
    %vm525 = vmor %vm523, %vm524
    %v526 = vsel %vm525, %v517, %v522
    %v527 = vrsqrt.pop %v515
    %v528 = vmul.f32 %v527, %v515
    %v529 = vmul.f32 %v528, %v527
    %v530 = vmul.f32 0.5, %v529
    %v531 = vsub.f32 1.5, %v530
    %v532 = vmul.f32 %v527, %v531
    %vm533 = vweird.f32 %v515
    %vm534 = vweird.f32 %v527
    %vm535 = vmor %vm533, %vm534
    %v536 = vsel %vm535, %v527, %v532
    %v537 = vrsqrt.pop %v516
    %v538 = vmul.f32 %v537, %v516
    %v539 = vmul.f32 %v538, %v537
    %v540 = vmul.f32 0.5, %v539
    %v541 = vsub.f32 1.5, %v540
    %v542 = vmul.f32 %v537, %v541
    %vm543 = vweird.f32 %v516
    %vm544 = vweird.f32 %v537
    %vm545 = vmor %vm543, %vm544
    %v546 = vsel %vm545, %v537, %v542
    %v547 = vmul.f32 %v496, %v526
    %v548 = vmul.f32 %v497, %v536
    %v549 = vmul.f32 %v498, %v546
    %v550 = vperm.slane %v361, 0
    %v551 = vmul.f32 %v547, %v550
    %v552 = vmul.f32 %v548, %v550
    %v553 = vmul.f32 %v549, %v550
    %v554 = vperm.slane %v362, 0
    %v555 = vadd.f32 %v551, %v554
    %v556 = vadd.f32 %v552, %v554
    %v557 = vadd.f32 %v553, %v554
    %v558 = vmax.f32 %v555, 0.0
    %v559 = vmax.f32 %v556, 0.0
    %v560 = vmax.f32 %v557, 0.0
    %v561 = vlaneseq
    %v562 = vshrl.u32 %v561, 7
    %v563 = vperm.slane %v28, 0
    %vm564 = vcmp.eq.s32.totalorder %v563, %v562
    %v565 = vsel %vm564, 1, 0
    %v566 = vcvt.s32.f32 %v565
    %vm567 = vcmask 195584
    %v568 = vsel %vm567, %v566, 0.0
    %569 = vadd.xlane.f32.xlu0 %v568
    %v570 = vpop.xlane.xlu0 %569
    %v571 = vpack.c.bf16 %v566, %v566
    %v572 = vpack.c.bf16 %v559, %v558
    %v573 = vpack.c.bf16 %v560, %v560
    %v575 = vsel %vm567, %v571, 0
    %v578 = vsel %vm426, %v573, 0
    %580 = vmatpush.bf16.msra.mxu0 0
    %581 = vmatpush.bf16.msra.mxu0 0
    %582 = vmatpush.bf16.msra.mxu0 0
    %583 = vmatpush.bf16.msra.mxu0 0
    %584 = vmatpush.bf16.msra.mxu0 0
    %585 = vmatpush.bf16.msra.mxu0 0
    %586 = vmatpush.bf16.msra.mxu0 %v578
    %587 = vmatpush.bf16.msra.mxu0 %v572
    %588 = vmatmul.bf16.gmra.mxu0 %v575
    %v589 = vpop.f32.mrf.mxu0
    %v590 = vadd.f32 0.0, %v589
    %v591 = vpop.f32.mrf.mxu0
    %592 = vdwg.mxu0
    %v593 = vperm.slane %v371, 0
    %v594 = vmul.f32 %v570, %v593
    %v596 = vsel %vm108, %v590, 0
    %598 = vmatpush.msra.mxu0 0.0
    %599 = vmatpush.msra.mxu0 0.0
    %600 = vmatpush.msra.mxu0 0.0
    %601 = vmatpush.msra.mxu0 0.0
    %602 = vmatpush.msra.mxu0 0.0
    %603 = vmatpush.msra.mxu0 0.0
    %604 = vmatpush.msra.mxu0 0.0
    %605 = vmatpush.msra.mxu0 0.0
    %606 = vmatpush.msra.mxu0 %v370
    %607 = vmatpush.msra.mxu0 %v369
    %608 = vmatpush.msra.mxu0 %v368
    %609 = vmatpush.msra.mxu0 %v367
    %610 = vmatpush.msra.mxu0 %v366
    %611 = vmatpush.msra.mxu0 %v365
    %612 = vmatpush.msra.mxu0 %v364
    %613 = vmatpush.msra.mxu0 %v363
    %614 = vmatmul.f32.gmra.mxu0 %v596
    %v615 = vpop.f32.mrf.mxu0
    %v616 = vadd.f32 %v594, %v615
    %617 = vdwg.mxu0
    %v618 = vsel %vm108, %v616, 0.0
    %619 = vadd.xlane.f32.xlu0 %v618
    %v620 = vpop.xlane.xlu0 %619
    %v621 = vmul.f32 %v620, %v492
    %v622 = vsub.f32 %v616, %v621
    %v623 = vmul.f32 %v622, %v622
    %v624 = vsel %vm108, %v623, 0.0
    %625 = vadd.xlane.f32.xlu0 %v624
    %v626 = vpop.xlane.xlu0 %625
    %v627 = vmul.f32 %v626, %v492
    %v628 = vadd.f32 %v627, 1e-05
    %v629 = vrsqrt.pop %v628
    %v630 = vmul.f32 %v629, %v628
    %v631 = vmul.f32 %v630, %v629
    %v632 = vmul.f32 0.5, %v631
    %v633 = vsub.f32 1.5, %v632
    %v634 = vmul.f32 %v629, %v633
    %vm635 = vweird.f32 %v628
    %vm636 = vweird.f32 %v629
    %vm637 = vmor %vm635, %vm636
    %v638 = vsel %vm637, %v629, %v634
    %v639 = vmul.f32 %v622, %v638
    %v640 = vperm.slane %v372, 0
    %v641 = vmul.f32 %v639, %v640
    %v642 = vperm.slane %v373, 0
    %v643 = vadd.f32 %v641, %v642
    %644 = vmatpush.msra.mxu0 0.0
    %645 = vmatpush.msra.mxu0 0.0
    %646 = vmatpush.msra.mxu0 0.0
    %647 = vmatpush.msra.mxu0 0.0
    %648 = vmatpush.msra.mxu0 0.0
    %649 = vmatpush.msra.mxu0 0.0
    %650 = vmatpush.msra.mxu0 0.0
    %651 = vmatpush.msra.mxu0 0.0
    %652 = vmatpush.msra.mxu0 %v291
    %653 = vmatpush.msra.mxu0 %v290
    %654 = vmatpush.msra.mxu0 %v289
    %655 = vmatpush.msra.mxu0 %v288
    %656 = vmatpush.msra.mxu0 %v287
    %657 = vmatpush.msra.mxu0 %v286
    %658 = vmatpush.msra.mxu0 %v285
    %659 = vmatpush.msra.mxu0 %v284
    %660 = vmatmul.f32.gmra.mxu0 %v338
    %v661 = vpop.f32.mrf.mxu0
    %v662 = vadd.f32 0.0, %v661
    %663 = vdwg.mxu0
    %v665 = vsel %vm108, %v643, 0
    %667 = vmatpush.msra.mxu0 0.0
    %668 = vmatpush.msra.mxu0 0.0
    %669 = vmatpush.msra.mxu0 0.0
    %670 = vmatpush.msra.mxu0 0.0
    %671 = vmatpush.msra.mxu0 0.0
    %672 = vmatpush.msra.mxu0 0.0
    %673 = vmatpush.msra.mxu0 0.0
    %674 = vmatpush.msra.mxu0 0.0
    %675 = vmatpush.msra.mxu0 %v283
    %676 = vmatpush.msra.mxu0 %v282
    %677 = vmatpush.msra.mxu0 %v281
    %678 = vmatpush.msra.mxu0 %v280
    %679 = vmatpush.msra.mxu0 %v279
    %680 = vmatpush.msra.mxu0 %v278
    %681 = vmatpush.msra.mxu0 %v277
    %682 = vmatpush.msra.mxu0 %v276
    %683 = vmatmul.f32.gmra.mxu0 %v665
    %v684 = vpop.f32.mrf.mxu0
    %v685 = vadd.f32 %v662, %v684
    %686 = vdwg.mxu0
    %v687 = vperm.slane %v374, 0
    %v688 = vadd.f32 %v685, %v687
    %v689 = vmax.f32 %v688, 0.0
    %v690 = vld [vmem:[%s5 + $0x2a0] sm:$0xff]
    %v691 = vld [vmem:[%s5 + $0x2a8] sm:$0xff]
    %v692 = vld [vmem:[%s5 + $0x2b0] sm:$0xff]
    %v693 = vld [vmem:[%s5 + $0x2b8] sm:$0xff]
    %v694 = vld [vmem:[%s5 + $0x2c0] sm:$0xff]
    %v695 = vld [vmem:[%s5 + $0x2c8] sm:$0xff]
    %v696 = vld [vmem:[%s5 + $0x2d0] sm:$0xff]
    %v697 = vld [vmem:[%s5 + $0x2d8] sm:$0xff]
    %v698 = vld [vmem:[%s5 + $0x2e0] sm:$0xff]
    %v699 = vld [vmem:[%s5 + $0x2e8] sm:$0xff]
    %v700 = vld [vmem:[%s5 + $0x2f0] sm:$0xff]
    %v701 = vld [vmem:[%s5 + $0x2f8] sm:$0xff]
    %v702 = vld [vmem:[%s5 + $0x300] sm:$0xff]
    %v703 = vld [vmem:[%s5 + $0x308] sm:$0xff]
    %v704 = vld [vmem:[%s5 + $0x310] sm:$0xff]
    %v705 = vld [vmem:[%s5 + $0x318] sm:$0xff]
    %v706 = vld [vmem:[%s5 + $0x220] sm:$0xff]
    %v707 = vld [vmem:[%s5 + $0x228] sm:$0xff]
    %v708 = vld [vmem:[%s5 + $0x230] sm:$0xff]
    %v709 = vld [vmem:[%s5 + $0x238] sm:$0xff]
    %v710 = vld [vmem:[%s5 + $0x240] sm:$0xff]
    %v711 = vld [vmem:[%s5 + $0x248] sm:$0xff]
    %v712 = vld [vmem:[%s5 + $0x250] sm:$0xff]
    %v713 = vld [vmem:[%s5 + $0x258] sm:$0xff]
    %v715 = vsel %vm108, %v689, 0
    %717 = vmatpush.msra.mxu0 0.0
    %718 = vmatpush.msra.mxu0 0.0
    %719 = vmatpush.msra.mxu0 0.0
    %720 = vmatpush.msra.mxu0 0.0
    %721 = vmatpush.msra.mxu0 0.0
    %722 = vmatpush.msra.mxu0 0.0
    %723 = vmatpush.msra.mxu0 0.0
    %724 = vmatpush.msra.mxu0 0.0
    %725 = vmatpush.msra.mxu0 %v713
    %726 = vmatpush.msra.mxu0 %v712
    %727 = vmatpush.msra.mxu0 %v711
    %728 = vmatpush.msra.mxu0 %v710
    %729 = vmatpush.msra.mxu0 %v709
    %730 = vmatpush.msra.mxu0 %v708
    %731 = vmatpush.msra.mxu0 %v707
    %732 = vmatpush.msra.mxu0 %v706
    %733 = vmatmul.f32.gmra.mxu0 %v715
    %v734 = vpop.f32.mrf.mxu0
    %v735 = vadd.f32 0.0, %v734
    %736 = vdwg.mxu0
    %v737 = vld [vmem:[%s5 + $0x1e0] sm:$0xff]
    %v738 = vld [vmem:[%s5 + $0x1e8] sm:$0xff]
    %v739 = vld [vmem:[%s5 + $0x1f0] sm:$0xff]
    %v740 = vld [vmem:[%s5 + $0x1f8] sm:$0xff]
    %v741 = vld [vmem:[%s5 + $0x200] sm:$0xff]
    %v742 = vld [vmem:[%s5 + $0x208] sm:$0xff]
    %v743 = vld [vmem:[%s5 + $0x210] sm:$0xff]
    %v744 = vld [vmem:[%s5 + $0x218] sm:$0xff]
    %745 = vmatpush.msra.mxu0 0.0
    %746 = vmatpush.msra.mxu0 0.0
    %747 = vmatpush.msra.mxu0 0.0
    %748 = vmatpush.msra.mxu0 0.0
    %749 = vmatpush.msra.mxu0 0.0
    %750 = vmatpush.msra.mxu0 0.0
    %751 = vmatpush.msra.mxu0 0.0
    %752 = vmatpush.msra.mxu0 0.0
    %753 = vmatpush.msra.mxu0 %v744
    %754 = vmatpush.msra.mxu0 %v743
    %755 = vmatpush.msra.mxu0 %v742
    %756 = vmatpush.msra.mxu0 %v741
    %757 = vmatpush.msra.mxu0 %v740
    %758 = vmatpush.msra.mxu0 %v739
    %759 = vmatpush.msra.mxu0 %v738
    %760 = vmatpush.msra.mxu0 %v737
    %761 = vmatmul.f32.gmra.mxu0 %v301
    %v762 = vpop.f32.mrf.mxu0
    %v763 = vadd.f32 0.0, %v762
    %764 = vmatmul.f32.gmra.mxu0 %v304
    %v765 = vpop.f32.mrf.mxu0
    %v766 = vadd.f32 0.0, %v765
    %767 = vdwg.mxu0
    %v768 = vld [vmem:[%s4 + $0xf] sm:$0x1]
    %v769 = vld [vmem:[%s4 + $0x10] sm:$0x1]
    %v770 = vld [vmem:[%s4 + $0x11] sm:$0x1]
    %v771 = vld [vmem:[%s5 + $0x260] sm:$0xff]
    %v772 = vld [vmem:[%s5 + $0x268] sm:$0xff]
    %v773 = vld [vmem:[%s5 + $0x270] sm:$0xff]
    %v774 = vld [vmem:[%s5 + $0x278] sm:$0xff]
    %v775 = vld [vmem:[%s5 + $0x280] sm:$0xff]
    %v776 = vld [vmem:[%s5 + $0x288] sm:$0xff]
    %v777 = vld [vmem:[%s5 + $0x290] sm:$0xff]
    %v778 = vld [vmem:[%s5 + $0x298] sm:$0xff]
    %v779 = vld [vmem:[%s4 + $0x12] sm:$0x1]
    %v780 = vld [vmem:[%s4 + $0x13] sm:$0x1]
    %v781 = vld [vmem:[%s4 + $0x14] sm:$0x1]
    %v782 = vld [vmem:[%s4 + $0x15] sm:$0x1]
    %v783 = vpack.c.bf16 %v735, %v735
    %v784 = vpack.c.bf16 %v766, %v763
    %785 = vmatpush.bf16.msra.mxu0 0
    %786 = vmatpush.bf16.msra.mxu0 0
    %787 = vmatpush.bf16.msra.mxu0 0
    %788 = vmatpush.bf16.msra.mxu0 0
    %789 = vmatpush.bf16.msra.mxu0 0
    %790 = vmatpush.bf16.msra.mxu0 0
    %791 = vmatpush.bf16.msra.mxu0 0
    %792 = vmatpush.bf16.msra.mxu0 %v784
    %793 = vmatmul.bf16.gmra.mxu0 %v450
    %v794 = vpop.f32.mrf.mxu0
    %v795 = vadd.f32 0.0, %v794
    %v796 = vpop.f32.mrf.mxu0
    %v797 = vadd.f32 0.0, %v796
    %798 = vmatmul.bf16.gmra.mxu0 %v453
    %v799 = vpop.f32.mrf.mxu0
    %v800 = vadd.f32 0.0, %v799
    %v801 = vpop.f32.mrf.mxu0
    %802 = vdwg.mxu0
    %v804 = vsel %vm426, %v783, 0
    %806 = vmatpush.bf16.msra.mxu0 0
    %807 = vmatpush.bf16.msra.mxu0 0
    %808 = vmatpush.bf16.msra.mxu0 0
    %809 = vmatpush.bf16.msra.mxu0 0
    %810 = vmatpush.bf16.msra.mxu0 0
    %811 = vmatpush.bf16.msra.mxu0 0
    %812 = vmatpush.bf16.msra.mxu0 0
    %813 = vmatpush.bf16.msra.mxu0 %v804
    %814 = vmatmul.bf16.gmra.mxu0 %v421
    %v815 = vpop.f32.mrf.mxu0
    %v816 = vadd.f32 %v795, %v815
    %v817 = vpop.f32.mrf.mxu0
    %v818 = vadd.f32 %v797, %v817
    %819 = vmatmul.bf16.gmra.mxu0 %v424
    %v820 = vpop.f32.mrf.mxu0
    %v821 = vadd.f32 %v800, %v820
    %v822 = vpop.f32.mrf.mxu0
    %823 = vdwg.mxu0
    %v824 = vperm.slane %v768, 0
    %v825 = vadd.f32 %v816, %v824
    %v826 = vadd.f32 %v818, %v824
    %v827 = vadd.f32 %v821, %v824
    %v828 = vsel %vm108, %v825, 0.0
    %829 = vadd.xlane.f32.xlu0 %v828
    %v830 = vpop.xlane.xlu0 %829
    %v831 = vsel %vm108, %v826, 0.0
    %832 = vadd.xlane.f32.xlu0 %v831
    %v833 = vpop.xlane.xlu0 %832
    %v834 = vsel %vm108, %v827, 0.0
    %835 = vadd.xlane.f32.xlu0 %v834
    %v836 = vpop.xlane.xlu0 %835
    %v837 = vmul.f32 %v830, %v492
    %v838 = vmul.f32 %v833, %v492
    %v839 = vmul.f32 %v836, %v492
    %v840 = vsub.f32 %v825, %v837
    %v841 = vsub.f32 %v826, %v838
    %v842 = vsub.f32 %v827, %v839
    %v843 = vmul.f32 %v840, %v840
    %v844 = vmul.f32 %v841, %v841
    %v845 = vmul.f32 %v842, %v842
    %v846 = vsel %vm108, %v843, 0.0
    %847 = vadd.xlane.f32.xlu0 %v846
    %v848 = vpop.xlane.xlu0 %847
    %v849 = vsel %vm108, %v844, 0.0
    %850 = vadd.xlane.f32.xlu0 %v849
    %v851 = vpop.xlane.xlu0 %850
    %v852 = vsel %vm108, %v845, 0.0
    %853 = vadd.xlane.f32.xlu0 %v852
    %v854 = vpop.xlane.xlu0 %853
    %v855 = vmul.f32 %v848, %v492
    %v856 = vmul.f32 %v851, %v492
    %v857 = vmul.f32 %v854, %v492
    %v858 = vadd.f32 %v855, 1e-05
    %v859 = vadd.f32 %v856, 1e-05
    %v860 = vadd.f32 %v857, 1e-05
    %v861 = vrsqrt.pop %v858
    %v862 = vmul.f32 %v861, %v858
    %v863 = vmul.f32 %v862, %v861
    %v864 = vmul.f32 0.5, %v863
    %v865 = vsub.f32 1.5, %v864
    %v866 = vmul.f32 %v861, %v865
    %vm867 = vweird.f32 %v858
    %vm868 = vweird.f32 %v861
    %vm869 = vmor %vm867, %vm868
    %v870 = vsel %vm869, %v861, %v866
    %v871 = vrsqrt.pop %v859
    %v872 = vmul.f32 %v871, %v859
    %v873 = vmul.f32 %v872, %v871
    %v874 = vmul.f32 0.5, %v873
    %v875 = vsub.f32 1.5, %v874
    %v876 = vmul.f32 %v871, %v875
    %vm877 = vweird.f32 %v859
    %vm878 = vweird.f32 %v871
    %vm879 = vmor %vm877, %vm878
    %v880 = vsel %vm879, %v871, %v876
    %v881 = vrsqrt.pop %v860
    %v882 = vmul.f32 %v881, %v860
    %v883 = vmul.f32 %v882, %v881
    %v884 = vmul.f32 0.5, %v883
    %v885 = vsub.f32 1.5, %v884
    %v886 = vmul.f32 %v881, %v885
    %vm887 = vweird.f32 %v860
    %vm888 = vweird.f32 %v881
    %vm889 = vmor %vm887, %vm888
    %v890 = vsel %vm889, %v881, %v886
    %v891 = vmul.f32 %v840, %v870
    %v892 = vmul.f32 %v841, %v880
    %v893 = vmul.f32 %v842, %v890
    %v894 = vperm.slane %v769, 0
    %v895 = vmul.f32 %v891, %v894
    %v896 = vmul.f32 %v892, %v894
    %v897 = vmul.f32 %v893, %v894
    %v898 = vperm.slane %v770, 0
    %v899 = vadd.f32 %v895, %v898
    %v900 = vadd.f32 %v896, %v898
    %v901 = vadd.f32 %v897, %v898
    %v902 = vmax.f32 %v899, 0.0
    %v903 = vmax.f32 %v900, 0.0
    %v904 = vmax.f32 %v901, 0.0
    %v905 = vadd.s32 %v562, 8
    %v906 = vperm.slane %v29, 0
    %vm907 = vcmp.eq.s32.totalorder %v906, %v562
    %vm908 = vcmp.eq.s32.totalorder %v906, %v905
    %v909 = vsel %vm907, 1, 0
    %v910 = vsel %vm908, 1, 0
    %v911 = vcvt.s32.f32 %v909
    %v912 = vcvt.s32.f32 %v910
    %v913 = vsel %vm567, %v911, 0.0
    %914 = vadd.xlane.f32.xlu0 %v913
    %v915 = vpop.xlane.xlu0 %914
    %v916 = vsel %vm567, %v912, 0.0
    %917 = vadd.xlane.f32.xlu0 %v916
    %v918 = vpop.xlane.xlu0 %917
    %v919 = vpack.c.bf16 %v912, %v911
    %v920 = vpack.c.bf16 %v903, %v902
    %v921 = vpack.c.bf16 %v904, %v904
    %v923 = vsel %vm567, %v919, 0
    %v926 = vsel %vm426, %v921, 0
    %928 = vmatpush.bf16.msra.mxu0 0
    %929 = vmatpush.bf16.msra.mxu0 0
    %930 = vmatpush.bf16.msra.mxu0 0
    %931 = vmatpush.bf16.msra.mxu0 0
    %932 = vmatpush.bf16.msra.mxu0 0
    %933 = vmatpush.bf16.msra.mxu0 0
    %934 = vmatpush.bf16.msra.mxu0 %v926
    %935 = vmatpush.bf16.msra.mxu0 %v920
    %936 = vmatmul.bf16.gmra.mxu0 %v923
    %v937 = vpop.f32.mrf.mxu0
    %v938 = vadd.f32 0.0, %v937
    %v939 = vpop.f32.mrf.mxu0
    %v940 = vadd.f32 0.0, %v939
    %941 = vdwg.mxu0
    %v942 = vperm.slane %v779, 0
    %v943 = vmul.f32 %v915, %v942
    %v944 = vmul.f32 %v918, %v942
    %v946 = vsel %vm108, %v938, 0
    %v949 = vsel %vm108, %v940, 0
    %951 = vmatpush.msra.mxu0 0.0
    %952 = vmatpush.msra.mxu0 0.0
    %953 = vmatpush.msra.mxu0 0.0
    %954 = vmatpush.msra.mxu0 0.0
    %955 = vmatpush.msra.mxu0 0.0
    %956 = vmatpush.msra.mxu0 0.0
    %957 = vmatpush.msra.mxu0 0.0
    %958 = vmatpush.msra.mxu0 0.0
    %959 = vmatpush.msra.mxu0 %v778
    %960 = vmatpush.msra.mxu0 %v777
    %961 = vmatpush.msra.mxu0 %v776
    %962 = vmatpush.msra.mxu0 %v775
    %963 = vmatpush.msra.mxu0 %v774
    %964 = vmatpush.msra.mxu0 %v773
    %965 = vmatpush.msra.mxu0 %v772
    %966 = vmatpush.msra.mxu0 %v771
    %967 = vmatmul.f32.gmra.mxu0 %v946
    %v968 = vpop.f32.mrf.mxu0
    %v969 = vadd.f32 %v943, %v968
    %970 = vmatmul.f32.gmra.mxu0 %v949
    %v971 = vpop.f32.mrf.mxu0
    %v972 = vadd.f32 %v944, %v971
    %973 = vdwg.mxu0
    %v974 = vsel %vm108, %v969, 0.0
    %975 = vadd.xlane.f32.xlu0 %v974
    %v976 = vpop.xlane.xlu0 %975
    %v977 = vsel %vm108, %v972, 0.0
    %978 = vadd.xlane.f32.xlu0 %v977
    %v979 = vpop.xlane.xlu0 %978
    %v980 = vmul.f32 %v976, %v492
    %v981 = vmul.f32 %v979, %v492
    %v982 = vsub.f32 %v969, %v980
    %v983 = vsub.f32 %v972, %v981
    %v984 = vmul.f32 %v982, %v982
    %v985 = vmul.f32 %v983, %v983
    %v986 = vsel %vm108, %v984, 0.0
    %987 = vadd.xlane.f32.xlu0 %v986
    %v988 = vpop.xlane.xlu0 %987
    %v989 = vsel %vm108, %v985, 0.0
    %990 = vadd.xlane.f32.xlu0 %v989
    %v991 = vpop.xlane.xlu0 %990
    %v992 = vmul.f32 %v988, %v492
    %v993 = vmul.f32 %v991, %v492
    %v994 = vadd.f32 %v992, 1e-05
    %v995 = vadd.f32 %v993, 1e-05
    %v996 = vrsqrt.pop %v994
    %v997 = vmul.f32 %v996, %v994
    %v998 = vmul.f32 %v997, %v996
    %v999 = vmul.f32 0.5, %v998
    %v1000 = vsub.f32 1.5, %v999
    %v1001 = vmul.f32 %v996, %v1000
    %vm1002 = vweird.f32 %v994
    %vm1003 = vweird.f32 %v996
    %vm1004 = vmor %vm1002, %vm1003
    %v1005 = vsel %vm1004, %v996, %v1001
    %v1006 = vrsqrt.pop %v995
    %v1007 = vmul.f32 %v1006, %v995
    %v1008 = vmul.f32 %v1007, %v1006
    %v1009 = vmul.f32 0.5, %v1008
    %v1010 = vsub.f32 1.5, %v1009
    %v1011 = vmul.f32 %v1006, %v1010
    %vm1012 = vweird.f32 %v995
    %vm1013 = vweird.f32 %v1006
    %vm1014 = vmor %vm1012, %vm1013
    %v1015 = vsel %vm1014, %v1006, %v1011
    %v1016 = vmul.f32 %v982, %v1005
    %v1017 = vmul.f32 %v983, %v1015
    %v1018 = vperm.slane %v780, 0
    %v1019 = vmul.f32 %v1016, %v1018
    %v1020 = vmul.f32 %v1017, %v1018
    %v1021 = vperm.slane %v781, 0
    %v1022 = vadd.f32 %v1019, %v1021
    %v1023 = vadd.f32 %v1020, %v1021
    %1024 = vmatpush.msra.mxu0 0.0
    %1025 = vmatpush.msra.mxu0 0.0
    %1026 = vmatpush.msra.mxu0 0.0
    %1027 = vmatpush.msra.mxu0 0.0
    %1028 = vmatpush.msra.mxu0 0.0
    %1029 = vmatpush.msra.mxu0 0.0
    %1030 = vmatpush.msra.mxu0 0.0
    %1031 = vmatpush.msra.mxu0 0.0
    %1032 = vmatpush.msra.mxu0 %v705
    %1033 = vmatpush.msra.mxu0 %v704
    %1034 = vmatpush.msra.mxu0 %v703
    %1035 = vmatpush.msra.mxu0 %v702
    %1036 = vmatpush.msra.mxu0 %v701
    %1037 = vmatpush.msra.mxu0 %v700
    %1038 = vmatpush.msra.mxu0 %v699
    %1039 = vmatpush.msra.mxu0 %v698
    %1040 = vmatmul.f32.gmra.mxu0 %v301
    %v1041 = vpop.f32.mrf.mxu0
    %v1042 = vadd.f32 0.0, %v1041
    %1043 = vmatmul.f32.gmra.mxu0 %v304
    %v1044 = vpop.f32.mrf.mxu0
    %v1045 = vadd.f32 0.0, %v1044
    %1046 = vdwg.mxu0
    %v1048 = vsel %vm108, %v1022, 0
    %v1051 = vsel %vm108, %v1023, 0
    %1053 = vmatpush.msra.mxu0 0.0
    %1054 = vmatpush.msra.mxu0 0.0
    %1055 = vmatpush.msra.mxu0 0.0
    %1056 = vmatpush.msra.mxu0 0.0
    %1057 = vmatpush.msra.mxu0 0.0
    %1058 = vmatpush.msra.mxu0 0.0
    %1059 = vmatpush.msra.mxu0 0.0
    %1060 = vmatpush.msra.mxu0 0.0
    %1061 = vmatpush.msra.mxu0 %v697
    %1062 = vmatpush.msra.mxu0 %v696
    %1063 = vmatpush.msra.mxu0 %v695
    %1064 = vmatpush.msra.mxu0 %v694
    %1065 = vmatpush.msra.mxu0 %v693
    %1066 = vmatpush.msra.mxu0 %v692
    %1067 = vmatpush.msra.mxu0 %v691
    %1068 = vmatpush.msra.mxu0 %v690
    %1069 = vmatmul.f32.gmra.mxu0 %v1048
    %v1070 = vpop.f32.mrf.mxu0
    %v1071 = vadd.f32 %v1042, %v1070
    %1072 = vmatmul.f32.gmra.mxu0 %v1051
    %v1073 = vpop.f32.mrf.mxu0
    %v1074 = vadd.f32 %v1045, %v1073
    %1075 = vdwg.mxu0
    %v1076 = vperm.slane %v782, 0
    %v1077 = vadd.f32 %v1071, %v1076
    %v1078 = vadd.f32 %v1074, %v1076
    %v1079 = vmax.f32 %v1077, 0.0
    %v1080 = vmax.f32 %v1078, 0.0
    %v1081 = vld [vmem:[%s5 + $0x320] sm:$0xff]
    %v1082 = vld [vmem:[%s5 + $0x328] sm:$0xff]
    %v1083 = vld [vmem:[%s5 + $0x330] sm:$0xff]
    %v1084 = vld [vmem:[%s5 + $0x338] sm:$0xff]
    %v1085 = vld [vmem:[%s5 + $0x340] sm:$0xff]
    %v1086 = vld [vmem:[%s5 + $0x348] sm:$0xff]
    %v1087 = vld [vmem:[%s5 + $0x350] sm:$0xff]
    %v1088 = vld [vmem:[%s5 + $0x358] sm:$0xff]
    %v1089 = vld [vmem:[%s4 + $0x16] sm:$0x1]
    %v1090 = vperm.slane %v1089, 0
    %v1092 = vsel %vm108, %v1079, 0
    %v1095 = vsel %vm108, %v1080, 0
    %1097 = vmatpush.msra.mxu0 0.0
    %1098 = vmatpush.msra.mxu0 0.0
    %1099 = vmatpush.msra.mxu0 0.0
    %1100 = vmatpush.msra.mxu0 0.0
    %1101 = vmatpush.msra.mxu0 0.0
    %1102 = vmatpush.msra.mxu0 0.0
    %1103 = vmatpush.msra.mxu0 0.0
    %1104 = vmatpush.msra.mxu0 0.0
    %1105 = vmatpush.msra.mxu0 %v1088
    %1106 = vmatpush.msra.mxu0 %v1087
    %1107 = vmatpush.msra.mxu0 %v1086
    %1108 = vmatpush.msra.mxu0 %v1085
    %1109 = vmatpush.msra.mxu0 %v1084
    %1110 = vmatpush.msra.mxu0 %v1083
    %1111 = vmatpush.msra.mxu0 %v1082
    %1112 = vmatpush.msra.mxu0 %v1081
    %1113 = vmatmul.f32.gmra.mxu0 %v1092
    %v1114 = vpop.f32.mrf.mxu0
    %v1115 = vadd.f32 %v1090, %v1114
    %1116 = vmatmul.f32.gmra.mxu0 %v1095
    %v1117 = vpop.f32.mrf.mxu0
    %v1118 = vadd.f32 %v1090, %v1117
    %1119 = vdwg.mxu0
    %v1120 = vmax.f32 %v1115, 0.0
    %v1121 = vmax.f32 %v1118, 0.0
    %v1122 = vld [vmem:[%s4 + $0x17] sm:$0x1]
    %v1124 = vsel %vm108, %v1122, 0
    %v1127 = vsel %vm108, %v1120, 0
    %v1130 = vsel %vm108, %v1121, 0
    %1132 = vmatpush.xpose.msra.mxu0 0.0
    %1133 = vmatpush.xpose.msra.mxu0 0.0
    %1134 = vmatpush.xpose.msra.mxu0 0.0
    %1135 = vmatpush.xpose.msra.mxu0 0.0
    %1136 = vmatpush.xpose.msra.mxu0 0.0
    %1137 = vmatpush.xpose.msra.mxu0 0.0
    %1138 = vmatpush.xpose.msra.mxu0 0.0
    %1139 = vmatpush.xpose.msra.mxu0 0.0
    %1140 = vmatpush.xpose.msra.mxu0 0.0
    %1141 = vmatpush.xpose.msra.mxu0 0.0
    %1142 = vmatpush.xpose.msra.mxu0 0.0
    %1143 = vmatpush.xpose.msra.mxu0 0.0
    %1144 = vmatpush.xpose.msra.mxu0 0.0
    %1145 = vmatpush.xpose.msra.mxu0 0.0
    %1146 = vmatpush.xpose.msra.mxu0 %v1130
    %1147 = vmatpush.xpose.msra.mxu0 %v1127
    %1148 = vmatmul.f32.gmra.mxu0 %v1124
    %v1149 = vpop.f32.mrf.mxu0
    %v1150 = vadd.f32 0.0, %v1149
    %1151 = vdwg.mxu0
    %vm1152 = vcmask 122880
    %1153 = vst.msk [vmem:[#allocation2] sm:$0x1] %vm1152, %v1150
    // Predicated region
    $region26: #{gnn2_forward.1} parent=1 // pred_check
      _
    $region27: #{gnn2_forward.1} parent=1 // pred_check_branch
      %1155 = sbr.rel (0) target = $region29
    $region28: #{gnn2_forward.1} parent=1 // pred_region
      %1157 = vsyncadd [#allocation3], 0
      %s1159 = sshll.u32 [#allocation2], 4
      %s1160 = int_to_ptr.vmem [resolvable:$true] %s1159
      %s1161 = sshll.u32 %s6, 4
      %s1162 = int_to_ptr.hbm [resolvable:$true] %s1161
      %1164 = dma.vmem_to_hbm [thread:$0]  %s1160, 16, %s1162, [#allocation3]
    $region29: #{gnn2_forward.1} parent=1 // pred_fallthru
      _
    // Predicated region
    $region30: #{gnn2_forward.1} parent=1 // pred_check
      _
    $region31: #{gnn2_forward.1} parent=1 // pred_check_branch
      %1166 = sbr.rel (0) target = $region33
    $region32: #{gnn2_forward.1} parent=1 // pred_region
      %1168 = dma.done [#allocation3], 16
    $region33: #{gnn2_forward.1} parent=1 // pred_fallthru
      _
    %1169 = vsyncpa [#allocation3], 1

</llo_original>
